<compile_context>
chip_gen: v6e
topology: v6e:2x2x1
jax: 0.10.0
libtpu: 0.0.40
codegen_flags: <defaults>
</compile_context>

<pallas_src>
import math

import jax
import jax.numpy as jnp
from jax.experimental import pallas as pl
from jax.experimental.pallas import tpu as pltpu


def _layer_norm(x, gamma, beta, eps=1e-5):
    mean = jnp.mean(x, axis=-1, keepdims=True)
    var = jnp.mean((x - mean) ** 2, axis=-1, keepdims=True)
    return (x - mean) * jax.lax.rsqrt(var + eps) * gamma + beta


def _cross_modal_attn_kernel(
    q_in_ref, kv_ref,
    wq_ref, bq_ref, wk_ref, bk_ref, wv_ref, bv_ref,
    wo_ref, bo_ref,
    g1_ref, be1_ref,
    w1_ref, b1_ref, w2_ref, b2_ref,
    g2_ref, be2_ref,
    out_ref,
    acc_ref,
):
    h = pl.program_id(1)
    bt, sq, d = q_in_ref.shape
    _, skv, _ = kv_ref.shape

    # Flatten the batch block into dense rows for every matmul / LayerNorm.
    # (Sq/Skv are multiples of the 8-sublane tile here, so this is layout-free.)
    xq = q_in_ref[...].reshape(bt * sq, d)
    xkv = kv_ref[...].reshape(bt * skv, d)

    # Head 0: initialize the accumulator with the residual + out-proj bias.
    @pl.when(h == 0)
    def _init():
        acc_ref[...] = xq + bo_ref[...]

    cdt = wq_ref.dtype  # matmul input dtype (f32 or bf16); accumulate in f32.

    # Per-head projections. Weights arrive (in, out) and head-sliced via the
    # BlockSpec; the 1/sqrt(head_dim) scale is already folded into wq/bq.
    qh = jnp.dot(xq.astype(cdt), wq_ref[0], preferred_element_type=jnp.float32) + bq_ref[0]
    kh = jnp.dot(xkv.astype(cdt), wk_ref[0], preferred_element_type=jnp.float32) + bk_ref[0]
    vh = jnp.dot(xkv.astype(cdt), wv_ref[0], preferred_element_type=jnp.float32) + bv_ref[0]

    hd = qh.shape[-1]
    qh = qh.reshape(bt, sq, hd)
    kh = kh.reshape(bt, skv, hd)
    vh = vh.reshape(bt, skv, hd)

    # Batched (over the fused batch rows) scaled-dot-product attention with a
    # numerically stable softmax; normalization is applied to the small PV
    # output rather than the (sq, skv) probability matrix.
    s = jnp.einsum("bqd,bkd->bqk", qh, kh, preferred_element_type=jnp.float32)
    s = s - jnp.max(s, axis=-1, keepdims=True)
    p = jnp.exp(s)
    l = jnp.sum(p, axis=-1, keepdims=True)
    o = jnp.einsum("bqk,bkd->bqd", p, vh, preferred_element_type=jnp.float32)
    o = o * pl.reciprocal(l, approx=True)
    o = o.reshape(bt * sq, hd)

    # Accumulate this head's slice of the output projection.
    acc_ref[...] += jnp.dot(o.astype(cdt), wo_ref[0], preferred_element_type=jnp.float32)

    # Last head: residual+LN1, FFN, residual+LN2, write the output block.
    @pl.when(h == pl.num_programs(1) - 1)
    def _finalize():
        x = _layer_norm(acc_ref[...], g1_ref[...], be1_ref[...])
        h1 = jnp.dot(x.astype(w1_ref.dtype), w1_ref[...],
                     preferred_element_type=jnp.float32) + b1_ref[...]
        h1 = jnp.maximum(h1, 0.0)
        # TODO(synk): for very large D on v7x (64 MiB VMEM), additionally tile the
        # 4*D FFN hidden dimension instead of materializing (bt*sq, 4D) at once.
        ffn = jnp.dot(h1.astype(w2_ref.dtype), w2_ref[...],
                      preferred_element_type=jnp.float32) + b2_ref[...]
        y = _layer_norm(x + ffn, g2_ref[...], be2_ref[...])
        out_ref[...] = y.reshape(bt, sq, d).astype(out_ref.dtype)


def _pick_block_b(batch, sq, skv, d, budget_bytes=8 << 20):
    """Largest divisor of `batch` whose per-step activation footprint stays small.

    Keeps the (double-buffered) query/kv/output blocks plus the in-kernel
    intermediates (q/k/v, scores, FFN hidden) well inside VMEM on v5e..v7x.
    """
    per_b = 4 * (sq * d * 6 + skv * d * 4 + sq * 4 * d)
    bb = max(1, min(batch, budget_bytes // max(per_b, 1)))
    while batch % bb:
        bb -= 1
    return bb


def cross_modal_attention(query, key_value, params, n_heads,
                          block_b=None, param_dtype=jnp.float32):
    B, Sq, D = query.shape
    _, Skv, _ = key_value.shape
    assert D % n_heads == 0
    hd = D // n_heads

    if block_b is None:
        block_b = _pick_block_b(B, Sq, Skv, D)
    assert B % block_b == 0

    scale = 1.0 / math.sqrt(hd)

    # --- one-time host-side weight preparation -------------------------------
    # Transpose to (in, out), fold the attention scale into Wq/bq, and split the
    # Q/K/V/O projections per head so BlockSpecs hand each grid step exactly the
    # slice it needs (no in-kernel transpose / slicing / concatenation).
    t = lambda w: jnp.asarray(w).T
    wq_h = (t(params["wq"]) * scale).reshape(D, n_heads, hd).transpose(1, 0, 2)  # (H, D, hd)
    wk_h = t(params["wk"]).reshape(D, n_heads, hd).transpose(1, 0, 2)            # (H, D, hd)
    wv_h = t(params["wv"]).reshape(D, n_heads, hd).transpose(1, 0, 2)            # (H, D, hd)
    wo_h = t(params["wo"]).reshape(n_heads, hd, D)                               # (H, hd, D)
    bq_h = (params["bq"] * scale).reshape(n_heads, 1, hd)
    bk_h = params["bk"].reshape(n_heads, 1, hd)
    bv_h = params["bv"].reshape(n_heads, 1, hd)
    w1_t = t(params["w1"])   # (D, 4D)
    w2_t = t(params["w2"])   # (4D, D)
    wq_h, wk_h, wv_h, wo_h, w1_t, w2_t = (
        x.astype(param_dtype) for x in (wq_h, wk_h, wv_h, wo_h, w1_t, w2_t))

    head3 = lambda shape: pl.BlockSpec(shape, lambda b, h: (h, 0, 0))
    full2 = lambda shape: pl.BlockSpec(shape, lambda b, h: (0, 0))

    in_specs = [
        pl.BlockSpec((block_b, Sq, D), lambda b, h: (b, 0, 0)),     # query
        pl.BlockSpec((block_b, Skv, D), lambda b, h: (b, 0, 0)),    # key_value
        head3((1, D, hd)), head3((1, 1, hd)),                       # Wq, bq (pre-scaled)
        head3((1, D, hd)), head3((1, 1, hd)),                       # Wk, bk
        head3((1, D, hd)), head3((1, 1, hd)),                       # Wv, bv
        head3((1, hd, D)), full2((1, D)),                           # Wo, bo
        full2((1, D)), full2((1, D)),                               # gamma1, beta1
        full2((D, 4 * D)), full2((1, 4 * D)),                       # W1, b1
        full2((4 * D, D)), full2((1, D)),                           # W2, b2
        full2((1, D)), full2((1, D)),                               # gamma2, beta2
    ]

    return pl.pallas_call(
        _cross_modal_attn_kernel,
        out_shape=jax.ShapeDtypeStruct((B, Sq, D), jnp.float32),
        grid_spec=pltpu.PrefetchScalarGridSpec(
            num_scalar_prefetch=0,
            grid=(B // block_b, n_heads),          # heads = reduction axis (last)
            in_specs=in_specs,
            out_specs=pl.BlockSpec((block_b, Sq, D), lambda b, h: (b, 0, 0)),
            scratch_shapes=[pltpu.VMEM((block_b * Sq, D), jnp.float32)],
        ),
        compiler_params=pltpu.CompilerParams(
            dimension_semantics=("parallel", "arbitrary"),
        ),
    )(
        query, key_value,
        wq_h, bq_h, wk_h, bk_h, wv_h, bv_h,
        wo_h, params["bo"],
        params["g1"], params["be1"],
        w1_t, params["b1"], w2_t, params["b2"],
        params["g2"], params["be2"],
    )


def reference_forward(query, key_value, params, n_heads):
    """Pure-JAX reference matching PyTorch nn.MultiheadAttention(eval) semantics."""
    B, Sq, D = query.shape
    hd = D // n_heads
    scale = 1.0 / math.sqrt(hd)

    q = query @ params["wq"].T + params["bq"]
    k = key_value @ params["wk"].T + params["bk"]
    v = key_value @ params["wv"].T + params["bv"]

    def split(x):
        return x.reshape(B, -1, n_heads, hd).transpose(0, 2, 1, 3)   # (B,H,S,hd)

    qh, kh, vh = split(q), split(k), split(v)
    s = jnp.einsum("bhqd,bhkd->bhqk", qh, kh) * scale
    p = jax.nn.softmax(s, axis=-1)
    o = jnp.einsum("bhqk,bhkd->bhqd", p, vh).transpose(0, 2, 1, 3).reshape(B, Sq, D)
    attn = o @ params["wo"].T + params["bo"]

    x = _layer_norm(query + attn, params["g1"], params["be1"])
    ffn = jnp.maximum(x @ params["w1"].T + params["b1"], 0.0) @ params["w2"].T + params["b2"]
    return _layer_norm(x + ffn, params["g2"], params["be2"])


def init_params(key, d_model):
    ks = jax.random.split(key, 12)
    s = 0.05
    return {
        "wq": s * jax.random.normal(ks[0], (d_model, d_model), jnp.float32),
        "wk": s * jax.random.normal(ks[1], (d_model, d_model), jnp.float32),
        "wv": s * jax.random.normal(ks[2], (d_model, d_model), jnp.float32),
        "wo": s * jax.random.normal(ks[3], (d_model, d_model), jnp.float32),
        "bq": s * jax.random.normal(ks[4], (1, d_model), jnp.float32),
        "bk": s * jax.random.normal(ks[5], (1, d_model), jnp.float32),
        "bv": s * jax.random.normal(ks[6], (1, d_model), jnp.float32),
        "bo": s * jax.random.normal(ks[7], (1, d_model), jnp.float32),
        "w1": s * jax.random.normal(ks[8], (4 * d_model, d_model), jnp.float32),
        "b1": s * jax.random.normal(ks[9], (1, 4 * d_model), jnp.float32),
        "w2": s * jax.random.normal(ks[10], (d_model, 4 * d_model), jnp.float32),
        "b2": s * jax.random.normal(ks[11], (1, d_model), jnp.float32),
        "g1": jnp.ones((1, d_model), jnp.float32),
        "be1": jnp.zeros((1, d_model), jnp.float32),
        "g2": jnp.ones((1, d_model), jnp.float32),
        "be2": jnp.zeros((1, d_model), jnp.float32),
    }


if __name__ == "__main__":
    B, Sq, Skv, D, H = 2, 8, 16, 32, 4

    key = jax.random.PRNGKey(0)
    k_q, k_kv, k_p = jax.random.split(key, 3)
    query = jax.random.normal(k_q, (B, Sq, D), jnp.float32)
    key_value = jax.random.normal(k_kv, (B, Skv, D), jnp.float32)
    params = init_params(k_p, D)

    out = cross_modal_attention(query, key_value, params, H)
    out = jax.block_until_ready(out)

    ref = reference_forward(query, key_value, params, H)
    assert out.shape == (B, Sq, D)
    # Tolerance is slightly looser than 1e-4 because the softmax denominator uses
    # the EUP approximate reciprocal (pl.reciprocal(approx=True)); everything else
    # is computed in f32.
    assert jnp.allclose(out, ref, atol=2e-3, rtol=2e-3), "mismatch vs pure-JAX reference"

    print("KERNEL_OK")
</pallas_src>

<mosaic_0001>
module attributes {stable_mosaic.version = 11 : i64} {
  func.func @_cross_modal_attn_kernel(%arg0: i32, %arg1: i32, %arg2: memref<2x8x32xf32, #tpu.memory_space<vmem>>, %arg3: memref<2x16x32xf32, #tpu.memory_space<vmem>>, %arg4: memref<1x32x8xf32, #tpu.memory_space<vmem>>, %arg5: memref<1x1x8xf32, #tpu.memory_space<vmem>>, %arg6: memref<1x32x8xf32, #tpu.memory_space<vmem>>, %arg7: memref<1x1x8xf32, #tpu.memory_space<vmem>>, %arg8: memref<1x32x8xf32, #tpu.memory_space<vmem>>, %arg9: memref<1x1x8xf32, #tpu.memory_space<vmem>>, %arg10: memref<1x8x32xf32, #tpu.memory_space<vmem>>, %arg11: memref<1x32xf32, #tpu.memory_space<vmem>>, %arg12: memref<1x32xf32, #tpu.memory_space<vmem>>, %arg13: memref<1x32xf32, #tpu.memory_space<vmem>>, %arg14: memref<32x128xf32, #tpu.memory_space<vmem>>, %arg15: memref<1x128xf32, #tpu.memory_space<vmem>>, %arg16: memref<128x32xf32, #tpu.memory_space<vmem>>, %arg17: memref<1x32xf32, #tpu.memory_space<vmem>>, %arg18: memref<1x32xf32, #tpu.memory_space<vmem>>, %arg19: memref<1x32xf32, #tpu.memory_space<vmem>>, %arg20: memref<2x8x32xf32, #tpu.memory_space<vmem>>, %arg21: memref<16x32xf32, #tpu.memory_space<vmem>>) attributes {dimension_semantics = [#tpu.dimension_semantics<parallel>, #tpu.dimension_semantics<arbitrary>], iteration_bounds = array<i64: 1, 4>, scalar_prefetch = 0 : i64, scratch_operands = 1 : i64, tpu.core_type = #tpu.core_type<tc>, window_params = [{transform_indices = @transform_0, window_bounds = array<i64: 2, 8, 32>}, {transform_indices = @transform_1, window_bounds = array<i64: 2, 16, 32>}, {transform_indices = @transform_2, window_bounds = array<i64: 1, 32, 8>}, {transform_indices = @transform_3, window_bounds = array<i64: 1, 1, 8>}, {transform_indices = @transform_4, window_bounds = array<i64: 1, 32, 8>}, {transform_indices = @transform_5, window_bounds = array<i64: 1, 1, 8>}, {transform_indices = @transform_6, window_bounds = array<i64: 1, 32, 8>}, {transform_indices = @transform_7, window_bounds = array<i64: 1, 1, 8>}, {transform_indices = @transform_8, window_bounds = array<i64: 1, 8, 32>}, {pipeline_mode = #tpu.pipeline_mode<synchronous>, transform_indices = @transform_9, window_bounds = array<i64: 1, 32>}, {pipeline_mode = #tpu.pipeline_mode<synchronous>, transform_indices = @transform_10, window_bounds = array<i64: 1, 32>}, {pipeline_mode = #tpu.pipeline_mode<synchronous>, transform_indices = @transform_11, window_bounds = array<i64: 1, 32>}, {pipeline_mode = #tpu.pipeline_mode<synchronous>, transform_indices = @transform_12, window_bounds = array<i64: 32, 128>}, {pipeline_mode = #tpu.pipeline_mode<synchronous>, transform_indices = @transform_13, window_bounds = array<i64: 1, 128>}, {pipeline_mode = #tpu.pipeline_mode<synchronous>, transform_indices = @transform_14, window_bounds = array<i64: 128, 32>}, {pipeline_mode = #tpu.pipeline_mode<synchronous>, transform_indices = @transform_15, window_bounds = array<i64: 1, 32>}, {pipeline_mode = #tpu.pipeline_mode<synchronous>, transform_indices = @transform_16, window_bounds = array<i64: 1, 32>}, {pipeline_mode = #tpu.pipeline_mode<synchronous>, transform_indices = @transform_17, window_bounds = array<i64: 1, 32>}, {transform_indices = @transform_18, window_bounds = array<i64: 2, 8, 32>}]} {
    %c0 = arith.constant 0 : index
    %c0_0 = arith.constant 0 : index
    %c0_1 = arith.constant 0 : index
    %0 = vector.load %arg2[%c0, %c0_0, %c0_1] : memref<2x8x32xf32, #tpu.memory_space<vmem>>, vector<2x8x32xf32>
    %1 = vector.shape_cast %0 : vector<2x8x32xf32> to vector<16x32xf32>
    %c0_2 = arith.constant 0 : index
    %c0_3 = arith.constant 0 : index
    %c0_4 = arith.constant 0 : index
    %2 = vector.load %arg3[%c0_2, %c0_3, %c0_4] : memref<2x16x32xf32, #tpu.memory_space<vmem>>, vector<2x16x32xf32>
    %3 = vector.shape_cast %2 : vector<2x16x32xf32> to vector<32x32xf32>
    %c0_i32 = arith.constant 0 : i32
    %4 = arith.cmpi eq, %arg1, %c0_i32 : i32
    %5 = arith.extui %4 : i1 to i32
    %c0_i32_5 = arith.constant 0 : i32
    %6 = arith.cmpi ne, %5, %c0_i32_5 : i32
    scf.if %6 {
      %c0_39 = arith.constant 0 : index
      %c0_40 = arith.constant 0 : index
      %53 = vector.load %arg11[%c0_39, %c0_40] : memref<1x32xf32, #tpu.memory_space<vmem>>, vector<1x32xf32>
      %54 = vector.broadcast %53 : vector<1x32xf32> to vector<16x32xf32>
      %55 = arith.addf %1, %54 : vector<16x32xf32>
      %c0_41 = arith.constant 0 : index
      %c0_42 = arith.constant 0 : index
      %56 = vector.load %arg21[%c0_41, %c0_42] : memref<16x32xf32, #tpu.memory_space<vmem>>, vector<16x32xf32>
      tpu.vector_store %arg21[%c0_41, %c0_42], %55 {strides = array<i32>} : memref<16x32xf32, #tpu.memory_space<vmem>>, vector<16x32xf32>,
    } else {
    }
    %c0_6 = arith.constant 0 : index
    %c0_7 = arith.constant 0 : index
    %c0_8 = arith.constant 0 : index
    %7 = vector.load %arg4[%c0_6, %c0_7, %c0_8] : memref<1x32x8xf32, #tpu.memory_space<vmem>>, vector<1x32x8xf32>
    %8 = vector.shape_cast %7 : vector<1x32x8xf32> to vector<32x8xf32>
    %cst = arith.constant dense<0.000000e+00> : vector<16x8xf32>
    %9 = tpu.matmul %1, %8, %cst {dimension_numbers = #tpu.dot_dimension_numbers<[1], [0], [0], [1], [0, 0, 1, 1], [], []>} : vector<16x32xf32>, vector<32x8xf32>, vector<16x8xf32> -> vector<16x8xf32>
    %c0_9 = arith.constant 0 : index
    %c0_10 = arith.constant 0 : index
    %c0_11 = arith.constant 0 : index
    %10 = vector.load %arg5[%c0_9, %c0_10, %c0_11] : memref<1x1x8xf32, #tpu.memory_space<vmem>>, vector<1x1x8xf32>
    %11 = vector.shape_cast %10 : vector<1x1x8xf32> to vector<1x8xf32>
    %12 = vector.broadcast %11 : vector<1x8xf32> to vector<16x8xf32>
    %13 = arith.addf %9, %12 : vector<16x8xf32>
    %c0_12 = arith.constant 0 : index
    %c0_13 = arith.constant 0 : index
    %c0_14 = arith.constant 0 : index
    %14 = vector.load %arg6[%c0_12, %c0_13, %c0_14] : memref<1x32x8xf32, #tpu.memory_space<vmem>>, vector<1x32x8xf32>
    %15 = vector.shape_cast %14 : vector<1x32x8xf32> to vector<32x8xf32>
    %cst_15 = arith.constant dense<0.000000e+00> : vector<32x8xf32>
    %16 = tpu.matmul %3, %15, %cst_15 {dimension_numbers = #tpu.dot_dimension_numbers<[1], [0], [0], [1], [0, 0, 1, 1], [], []>} : vector<32x32xf32>, vector<32x8xf32>, vector<32x8xf32> -> vector<32x8xf32>
    %c0_16 = arith.constant 0 : index
    %c0_17 = arith.constant 0 : index
    %c0_18 = arith.constant 0 : index
    %17 = vector.load %arg7[%c0_16, %c0_17, %c0_18] : memref<1x1x8xf32, #tpu.memory_space<vmem>>, vector<1x1x8xf32>
    %18 = vector.shape_cast %17 : vector<1x1x8xf32> to vector<1x8xf32>
    %19 = vector.broadcast %18 : vector<1x8xf32> to vector<32x8xf32>
    %20 = arith.addf %16, %19 : vector<32x8xf32>
    %c0_19 = arith.constant 0 : index
    %c0_20 = arith.constant 0 : index
    %c0_21 = arith.constant 0 : index
    %21 = vector.load %arg8[%c0_19, %c0_20, %c0_21] : memref<1x32x8xf32, #tpu.memory_space<vmem>>, vector<1x32x8xf32>
    %22 = vector.shape_cast %21 : vector<1x32x8xf32> to vector<32x8xf32>
    %cst_22 = arith.constant dense<0.000000e+00> : vector<32x8xf32>
    %23 = tpu.matmul %3, %22, %cst_22 {dimension_numbers = #tpu.dot_dimension_numbers<[1], [0], [0], [1], [0, 0, 1, 1], [], []>} : vector<32x32xf32>, vector<32x8xf32>, vector<32x8xf32> -> vector<32x8xf32>
    %c0_23 = arith.constant 0 : index
    %c0_24 = arith.constant 0 : index
    %c0_25 = arith.constant 0 : index
    %24 = vector.load %arg9[%c0_23, %c0_24, %c0_25] : memref<1x1x8xf32, #tpu.memory_space<vmem>>, vector<1x1x8xf32>
    %25 = vector.shape_cast %24 : vector<1x1x8xf32> to vector<1x8xf32>
    %26 = vector.broadcast %25 : vector<1x8xf32> to vector<32x8xf32>
    %27 = arith.addf %23, %26 : vector<32x8xf32>
    %28 = vector.shape_cast %13 : vector<16x8xf32> to vector<2x8x8xf32>
    %29 = vector.shape_cast %20 : vector<32x8xf32> to vector<2x16x8xf32>
    %30 = vector.shape_cast %27 : vector<32x8xf32> to vector<2x16x8xf32>
    "tpu.trace_start"() <{level = 10 : i32, message = "bqd,bkd->bqk"}> : () -> ()
    %cst_26 = arith.constant dense<0.000000e+00> : vector<2x8x16xf32>
    %31 = tpu.matmul %28, %29, %cst_26 {dimension_numbers = #tpu.dot_dimension_numbers<[2], [2], [1], [1], [0, 0, 0, 1, 1, 1], [0], [0]>} : vector<2x8x8xf32>, vector<2x16x8xf32>, vector<2x8x16xf32> -> vector<2x8x16xf32>
    "tpu.trace_stop"() : () -> ()
    %cst_27 = arith.constant dense<0xFF800000> : vector<2x8xf32>
    %32 = vector.multi_reduction <maximumf>, %31, %cst_27 [2] : vector<2x8x16xf32> to vector<2x8xf32>
    %33 = vector.shape_cast %32 : vector<2x8xf32> to vector<2x8x1xf32>
    %34 = vector.broadcast %33 : vector<2x8x1xf32> to vector<2x8x16xf32>
    %35 = arith.subf %31, %34 : vector<2x8x16xf32>
    %36 = math.exp %35 : vector<2x8x16xf32>
    %cst_28 = arith.constant dense<0.000000e+00> : vector<2x8xf32>
    %37 = vector.multi_reduction <add>, %36, %cst_28 [2] : vector<2x8x16xf32> to vector<2x8xf32>
    %38 = vector.shape_cast %37 : vector<2x8xf32> to vector<2x8x1xf32>
    "tpu.trace_start"() <{level = 10 : i32, message = "bqk,bkd->bqd"}> : () -> ()
    %cst_29 = arith.constant dense<0.000000e+00> : vector<2x8x8xf32>
    %39 = tpu.matmul %36, %30, %cst_29 {dimension_numbers = #tpu.dot_dimension_numbers<[2], [1], [1], [2], [0, 0, 0, 1, 1, 2], [0], [0]>} : vector<2x8x16xf32>, vector<2x16x8xf32>, vector<2x8x8xf32> -> vector<2x8x8xf32>
    "tpu.trace_stop"() : () -> ()
    %40 = tpu.reciprocal %38 {approx = true} : vector<2x8x1xf32> -> vector<2x8x1xf32>
    %41 = vector.broadcast %40 : vector<2x8x1xf32> to vector<2x8x8xf32>
    %42 = arith.mulf %39, %41 : vector<2x8x8xf32>
    %43 = vector.shape_cast %42 : vector<2x8x8xf32> to vector<16x8xf32>
    %c0_30 = arith.constant 0 : index
    %c0_31 = arith.constant 0 : index
    %44 = vector.load %arg21[%c0_30, %c0_31] : memref<16x32xf32, #tpu.memory_space<vmem>>, vector<16x32xf32>
    %c0_32 = arith.constant 0 : index
    %c0_33 = arith.constant 0 : index
    %c0_34 = arith.constant 0 : index
    %45 = vector.load %arg10[%c0_32, %c0_33, %c0_34] : memref<1x8x32xf32, #tpu.memory_space<vmem>>, vector<1x8x32xf32>
    %46 = vector.shape_cast %45 : vector<1x8x32xf32> to vector<8x32xf32>
    %cst_35 = arith.constant dense<0.000000e+00> : vector<16x32xf32>
    %47 = tpu.matmul %43, %46, %cst_35 {dimension_numbers = #tpu.dot_dimension_numbers<[1], [0], [0], [1], [0, 0, 1, 1], [], []>} : vector<16x8xf32>, vector<8x32xf32>, vector<16x32xf32> -> vector<16x32xf32>
    %48 = arith.addf %44, %47 : vector<16x32xf32>
    %c0_36 = arith.constant 0 : index
    %c0_37 = arith.constant 0 : index
    %49 = vector.load %arg21[%c0_36, %c0_37] : memref<16x32xf32, #tpu.memory_space<vmem>>, vector<16x32xf32>
    tpu.vector_store %arg21[%c0_36, %c0_37], %48 {strides = array<i32>} : memref<16x32xf32, #tpu.memory_space<vmem>>, vector<16x32xf32>,
    %c3_i32 = arith.constant 3 : i32
    %50 = arith.cmpi eq, %arg1, %c3_i32 : i32
    %51 = arith.extui %50 : i1 to i32
    %c0_i32_38 = arith.constant 0 : i32
    %52 = arith.cmpi ne, %51, %c0_i32_38 : i32
    scf.if %52 {
      %c0_39 = arith.constant 0 : index
      %c0_40 = arith.constant 0 : index
      %53 = vector.load %arg21[%c0_39, %c0_40] : memref<16x32xf32, #tpu.memory_space<vmem>>, vector<16x32xf32>
      %c0_41 = arith.constant 0 : index
      %c0_42 = arith.constant 0 : index
      %54 = vector.load %arg12[%c0_41, %c0_42] : memref<1x32xf32, #tpu.memory_space<vmem>>, vector<1x32xf32>
      %c0_43 = arith.constant 0 : index
      %c0_44 = arith.constant 0 : index
      %55 = vector.load %arg13[%c0_43, %c0_44] : memref<1x32xf32, #tpu.memory_space<vmem>>, vector<1x32xf32>
      %cst_45 = arith.constant dense<0.000000e+00> : vector<16xf32>
      %56 = vector.multi_reduction <add>, %53, %cst_45 [1] : vector<16x32xf32> to vector<16xf32>
      %57 = vector.shape_cast %56 : vector<16xf32> to vector<16x1xf32>
      %cst_46 = arith.constant 3.200000e+01 : f32
      %58 = vector.broadcast %cst_46 : f32 to vector<16x1xf32>
      %59 = arith.divf %57, %58 : vector<16x1xf32>
      %60 = vector.broadcast %59 : vector<16x1xf32> to vector<16x32xf32>
      %61 = arith.subf %53, %60 : vector<16x32xf32>
      %62 = arith.mulf %61, %61 : vector<16x32xf32>
      %cst_47 = arith.constant dense<0.000000e+00> : vector<16xf32>
      %63 = vector.multi_reduction <add>, %62, %cst_47 [1] : vector<16x32xf32> to vector<16xf32>
      %64 = vector.shape_cast %63 : vector<16xf32> to vector<16x1xf32>
      %cst_48 = arith.constant 3.200000e+01 : f32
      %65 = vector.broadcast %cst_48 : f32 to vector<16x1xf32>
      %66 = arith.divf %64, %65 : vector<16x1xf32>
      %67 = vector.broadcast %59 : vector<16x1xf32> to vector<16x32xf32>
      %68 = arith.subf %53, %67 : vector<16x32xf32>
      %cst_49 = arith.constant 9.99999974E-6 : f32
      %69 = vector.broadcast %cst_49 : f32 to vector<16x1xf32>
      %70 = arith.addf %66, %69 : vector<16x1xf32>
      %71 = math.rsqrt %70 : vector<16x1xf32>
      %72 = vector.broadcast %71 : vector<16x1xf32> to vector<16x32xf32>
      %73 = arith.mulf %68, %72 : vector<16x32xf32>
      %74 = vector.broadcast %54 : vector<1x32xf32> to vector<16x32xf32>
      %75 = arith.mulf %73, %74 : vector<16x32xf32>
      %76 = vector.broadcast %55 : vector<1x32xf32> to vector<16x32xf32>
      %77 = arith.addf %75, %76 : vector<16x32xf32>
      %c0_50 = arith.constant 0 : index
      %c0_51 = arith.constant 0 : index
      %78 = vector.load %arg14[%c0_50, %c0_51] : memref<32x128xf32, #tpu.memory_space<vmem>>, vector<32x128xf32>
      %cst_52 = arith.constant dense<0.000000e+00> : vector<16x128xf32>
      %79 = tpu.matmul %77, %78, %cst_52 {dimension_numbers = #tpu.dot_dimension_numbers<[1], [0], [0], [1], [0, 0, 1, 1], [], []>} : vector<16x32xf32>, vector<32x128xf32>, vector<16x128xf32> -> vector<16x128xf32>
      %c0_53 = arith.constant 0 : index
      %c0_54 = arith.constant 0 : index
      %80 = vector.load %arg15[%c0_53, %c0_54] : memref<1x128xf32, #tpu.memory_space<vmem>>, vector<1x128xf32>
      %81 = vector.broadcast %80 : vector<1x128xf32> to vector<16x128xf32>
      %82 = arith.addf %79, %81 : vector<16x128xf32>
      %cst_55 = arith.constant 0.000000e+00 : f32
      %83 = vector.broadcast %cst_55 : f32 to vector<16x128xf32>
      %84 = arith.maximumf %82, %83 : vector<16x128xf32>
      %c0_56 = arith.constant 0 : index
      %c0_57 = arith.constant 0 : index
      %85 = vector.load %arg16[%c0_56, %c0_57] : memref<128x32xf32, #tpu.memory_space<vmem>>, vector<128x32xf32>
      %cst_58 = arith.constant dense<0.000000e+00> : vector<16x32xf32>
      %86 = tpu.matmul %84, %85, %cst_58 {dimension_numbers = #tpu.dot_dimension_numbers<[1], [0], [0], [1], [0, 0, 1, 1], [], []>} : vector<16x128xf32>, vector<128x32xf32>, vector<16x32xf32> -> vector<16x32xf32>
      %c0_59 = arith.constant 0 : index
      %c0_60 = arith.constant 0 : index
      %87 = vector.load %arg17[%c0_59, %c0_60] : memref<1x32xf32, #tpu.memory_space<vmem>>, vector<1x32xf32>
      %88 = vector.broadcast %87 : vector<1x32xf32> to vector<16x32xf32>
      %89 = arith.addf %86, %88 : vector<16x32xf32>
      %90 = arith.addf %77, %89 : vector<16x32xf32>
      %c0_61 = arith.constant 0 : index
      %c0_62 = arith.constant 0 : index
      %91 = vector.load %arg18[%c0_61, %c0_62] : memref<1x32xf32, #tpu.memory_space<vmem>>, vector<1x32xf32>
      %c0_63 = arith.constant 0 : index
      %c0_64 = arith.constant 0 : index
      %92 = vector.load %arg19[%c0_63, %c0_64] : memref<1x32xf32, #tpu.memory_space<vmem>>, vector<1x32xf32>
      %cst_65 = arith.constant dense<0.000000e+00> : vector<16xf32>
      %93 = vector.multi_reduction <add>, %90, %cst_65 [1] : vector<16x32xf32> to vector<16xf32>
      %94 = vector.shape_cast %93 : vector<16xf32> to vector<16x1xf32>
      %cst_66 = arith.constant 3.200000e+01 : f32
      %95 = vector.broadcast %cst_66 : f32 to vector<16x1xf32>
      %96 = arith.divf %94, %95 : vector<16x1xf32>
      %97 = vector.broadcast %96 : vector<16x1xf32> to vector<16x32xf32>
      %98 = arith.subf %90, %97 : vector<16x32xf32>
      %99 = arith.mulf %98, %98 : vector<16x32xf32>
      %cst_67 = arith.constant dense<0.000000e+00> : vector<16xf32>
      %100 = vector.multi_reduction <add>, %99, %cst_67 [1] : vector<16x32xf32> to vector<16xf32>
      %101 = vector.shape_cast %100 : vector<16xf32> to vector<16x1xf32>
      %cst_68 = arith.constant 3.200000e+01 : f32
      %102 = vector.broadcast %cst_68 : f32 to vector<16x1xf32>
      %103 = arith.divf %101, %102 : vector<16x1xf32>
      %104 = vector.broadcast %96 : vector<16x1xf32> to vector<16x32xf32>
      %105 = arith.subf %90, %104 : vector<16x32xf32>
      %cst_69 = arith.constant 9.99999974E-6 : f32
      %106 = vector.broadcast %cst_69 : f32 to vector<16x1xf32>
      %107 = arith.addf %103, %106 : vector<16x1xf32>
      %108 = math.rsqrt %107 : vector<16x1xf32>
      %109 = vector.broadcast %108 : vector<16x1xf32> to vector<16x32xf32>
      %110 = arith.mulf %105, %109 : vector<16x32xf32>
      %111 = vector.broadcast %91 : vector<1x32xf32> to vector<16x32xf32>
      %112 = arith.mulf %110, %111 : vector<16x32xf32>
      %113 = vector.broadcast %92 : vector<1x32xf32> to vector<16x32xf32>
      %114 = arith.addf %112, %113 : vector<16x32xf32>
      %115 = vector.shape_cast %114 : vector<16x32xf32> to vector<2x8x32xf32>
      %c0_70 = arith.constant 0 : index
      %c0_71 = arith.constant 0 : index
      %c0_72 = arith.constant 0 : index
      %116 = vector.load %arg20[%c0_70, %c0_71, %c0_72] : memref<2x8x32xf32, #tpu.memory_space<vmem>>, vector<2x8x32xf32>
      tpu.vector_store %arg20[%c0_70, %c0_71, %c0_72], %115 {strides = array<i32>} : memref<2x8x32xf32, #tpu.memory_space<vmem>>, vector<2x8x32xf32>,
    } else {
    }
    return
  }
  func.func @transform_0(%arg0: i32, %arg1: i32) -> (i32, i32, i32) {
    %c0_i32 = arith.constant 0 : i32
    %c0_i32_0 = arith.constant 0 : i32
    %c0_i32_1 = arith.constant 0 : i32
    return %arg0, %c0_i32, %c0_i32_0 : i32, i32, i32
  }
  func.func @transform_1(%arg0: i32, %arg1: i32) -> (i32, i32, i32) {
    %c0_i32 = arith.constant 0 : i32
    %c0_i32_0 = arith.constant 0 : i32
    %c0_i32_1 = arith.constant 0 : i32
    return %arg0, %c0_i32, %c0_i32_0 : i32, i32, i32
  }
  func.func @transform_2(%arg0: i32, %arg1: i32) -> (i32, i32, i32) {
    %c0_i32 = arith.constant 0 : i32
    %c0_i32_0 = arith.constant 0 : i32
    %c0_i32_1 = arith.constant 0 : i32
    return %arg1, %c0_i32, %c0_i32_0 : i32, i32, i32
  }
  func.func @transform_3(%arg0: i32, %arg1: i32) -> (i32, i32, i32) {
    %c0_i32 = arith.constant 0 : i32
    %c0_i32_0 = arith.constant 0 : i32
    %c0_i32_1 = arith.constant 0 : i32
    return %arg1, %c0_i32, %c0_i32_0 : i32, i32, i32
  }
  func.func @transform_4(%arg0: i32, %arg1: i32) -> (i32, i32, i32) {
    %c0_i32 = arith.constant 0 : i32
    %c0_i32_0 = arith.constant 0 : i32
    %c0_i32_1 = arith.constant 0 : i32
    return %arg1, %c0_i32, %c0_i32_0 : i32, i32, i32
  }
  func.func @transform_5(%arg0: i32, %arg1: i32) -> (i32, i32, i32) {
    %c0_i32 = arith.constant 0 : i32
    %c0_i32_0 = arith.constant 0 : i32
    %c0_i32_1 = arith.constant 0 : i32
    return %arg1, %c0_i32, %c0_i32_0 : i32, i32, i32
  }
  func.func @transform_6(%arg0: i32, %arg1: i32) -> (i32, i32, i32) {
    %c0_i32 = arith.constant 0 : i32
    %c0_i32_0 = arith.constant 0 : i32
    %c0_i32_1 = arith.constant 0 : i32
    return %arg1, %c0_i32, %c0_i32_0 : i32, i32, i32
  }
  func.func @transform_7(%arg0: i32, %arg1: i32) -> (i32, i32, i32) {
    %c0_i32 = arith.constant 0 : i32
    %c0_i32_0 = arith.constant 0 : i32
    %c0_i32_1 = arith.constant 0 : i32
    return %arg1, %c0_i32, %c0_i32_0 : i32, i32, i32
  }
  func.func @transform_8(%arg0: i32, %arg1: i32) -> (i32, i32, i32) {
    %c0_i32 = arith.constant 0 : i32
    %c0_i32_0 = arith.constant 0 : i32
    %c0_i32_1 = arith.constant 0 : i32
    return %arg1, %c0_i32, %c0_i32_0 : i32, i32, i32
  }
  func.func @transform_9(%arg0: i32, %arg1: i32) -> (i32, i32) {
    %c0_i32 = arith.constant 0 : i32
    %c0_i32_0 = arith.constant 0 : i32
    %c0_i32_1 = arith.constant 0 : i32
    return %c0_i32, %c0_i32_0 : i32, i32
  }
  func.func @transform_10(%arg0: i32, %arg1: i32) -> (i32, i32) {
    %c0_i32 = arith.constant 0 : i32
    %c0_i32_0 = arith.constant 0 : i32
    %c0_i32_1 = arith.constant 0 : i32
    return %c0_i32, %c0_i32_0 : i32, i32
  }
  func.func @transform_11(%arg0: i32, %arg1: i32) -> (i32, i32) {
    %c0_i32 = arith.constant 0 : i32
    %c0_i32_0 = arith.constant 0 : i32
    %c0_i32_1 = arith.constant 0 : i32
    return %c0_i32, %c0_i32_0 : i32, i32
  }
  func.func @transform_12(%arg0: i32, %arg1: i32) -> (i32, i32) {
    %c0_i32 = arith.constant 0 : i32
    %c0_i32_0 = arith.constant 0 : i32
    %c0_i32_1 = arith.constant 0 : i32
    return %c0_i32, %c0_i32_0 : i32, i32
  }
  func.func @transform_13(%arg0: i32, %arg1: i32) -> (i32, i32) {
    %c0_i32 = arith.constant 0 : i32
    %c0_i32_0 = arith.constant 0 : i32
    %c0_i32_1 = arith.constant 0 : i32
    return %c0_i32, %c0_i32_0 : i32, i32
  }
  func.func @transform_14(%arg0: i32, %arg1: i32) -> (i32, i32) {
    %c0_i32 = arith.constant 0 : i32
    %c0_i32_0 = arith.constant 0 : i32
    %c0_i32_1 = arith.constant 0 : i32
    return %c0_i32, %c0_i32_0 : i32, i32
  }
  func.func @transform_15(%arg0: i32, %arg1: i32) -> (i32, i32) {
    %c0_i32 = arith.constant 0 : i32
    %c0_i32_0 = arith.constant 0 : i32
    %c0_i32_1 = arith.constant 0 : i32
    return %c0_i32, %c0_i32_0 : i32, i32
  }
  func.func @transform_16(%arg0: i32, %arg1: i32) -> (i32, i32) {
    %c0_i32 = arith.constant 0 : i32
    %c0_i32_0 = arith.constant 0 : i32
    %c0_i32_1 = arith.constant 0 : i32
    return %c0_i32, %c0_i32_0 : i32, i32
  }
  func.func @transform_17(%arg0: i32, %arg1: i32) -> (i32, i32) {
    %c0_i32 = arith.constant 0 : i32
    %c0_i32_0 = arith.constant 0 : i32
    %c0_i32_1 = arith.constant 0 : i32
    return %c0_i32, %c0_i32_0 : i32, i32
  }
  func.func @transform_18(%arg0: i32, %arg1: i32) -> (i32, i32, i32) {
    %c0_i32 = arith.constant 0 : i32
    %c0_i32_0 = arith.constant 0 : i32
    %c0_i32_1 = arith.constant 0 : i32
    return %arg0, %c0_i32, %c0_i32_0 : i32, i32, i32
  }
}

</mosaic_0001>

<llo_original>
// kernel: tpu_custom_call.1
$region0: #{tpu_custom_call.1}
  #allocation0 [shape = 'u32[]', space=smem, size = 0x4, offset = 0x4, fixed_abs, tag = 'smem constant byte address 0x4 - core index']
  #allocation1 [shape = 'u32[144,128]{1,0:T(1,128)}', space=vmem, size = 0x12000, scoped, tag = 'internal scratch']
  #allocation2 [shape = 'f32[16,32]{1,0:T(8,128)}', space=vmem, size = 0x2000, scoped, tag = 'scratch operand']
  %s0 = inlined_call_operand.vmem [shape: f32[2,8,32], index: 0, kind: input, shape index: {}]
  %s1 = inlined_call_operand.vmem [shape: f32[2,16,32], index: 1, kind: input, shape index: {}]
  %s2 = inlined_call_operand.vmem [shape: f32[4,32,8], index: 2, kind: input, shape index: {}]
  %s3 = inlined_call_operand.vmem [shape: f32[4,1,8], index: 3, kind: input, shape index: {}]
  %s4 = inlined_call_operand.vmem [shape: f32[4,32,8], index: 4, kind: input, shape index: {}]
  %s5 = inlined_call_operand.vmem [shape: f32[4,1,8], index: 5, kind: input, shape index: {}]
  %s6 = inlined_call_operand.vmem [shape: f32[4,32,8], index: 6, kind: input, shape index: {}]
  %s7 = inlined_call_operand.vmem [shape: f32[4,1,8], index: 7, kind: input, shape index: {}]
  %s8 = inlined_call_operand.vmem [shape: f32[4,8,32], index: 8, kind: input, shape index: {}]
  %s9 = inlined_call_operand.vmem [shape: f32[1,32], index: 9, kind: input, shape index: {}]
  %s10 = inlined_call_operand.vmem [shape: f32[1,32], index: 10, kind: input, shape index: {}]
  %s11 = inlined_call_operand.vmem [shape: f32[1,32], index: 11, kind: input, shape index: {}]
  %s12 = inlined_call_operand.vmem [shape: f32[32,128], index: 12, kind: input, shape index: {}]
  %s13 = inlined_call_operand.vmem [shape: f32[1,128], index: 13, kind: input, shape index: {}]
  %s14 = inlined_call_operand.vmem [shape: f32[128,32], index: 14, kind: input, shape index: {}]
  %s15 = inlined_call_operand.vmem [shape: f32[1,32], index: 15, kind: input, shape index: {}]
  %s16 = inlined_call_operand.vmem [shape: f32[1,32], index: 16, kind: input, shape index: {}]
  %s17 = inlined_call_operand.vmem [shape: f32[1,32], index: 17, kind: input, shape index: {}]
  %s18 = inlined_call_operand.hbm [shape: f32[2,8,32], index: 18, kind: output, shape index: {}]
  %s19 = sld [smem:[#allocation0]]
  $region113: #{tpu_custom_call.1} parent=0
    _
  %s21 = ssub.s32 1, %s19
  %s22 = scalar_select 0, %s21, %s19
  $region1: #{tpu_custom_call.1} parent=0
    #allocation3 [shape = 'u8[8192]{0}', space=vmem, size = 0x2000, scoped, tag = 'output window, operand 0, single buffered']
    #allocation4 [shape = 's32[2]{0}', space=sflag, size = 0x8, scoped, tag = 'scoped memory for tpu_custom_call.1']
    %23 = vsyncpa [#allocation4], 0
    loop: start=0, step=1, limit=6
    $region2: #{tpu_custom_call.1} parent=1 // loop_pre_header
      _
    $region3: #{tpu_custom_call.1} parent=1 // loop_header
      %s25 = sphi 0, %s29
      %p26 = scmp.ge.s32.totalorder %s25, 6
      %s32 = sphi 0, %s44
      %s33 = sphi 0, %s40
      %s34 = sphi 0, %s32
      %s35 = sphi 0, %s33
      %s36 = sphi 0, %s34
      %s37 = sphi 0, %s35
      %s47 = sphi 0, %s49
      %s50 = sphi 0, %s47
      %s51 = sphi 0, %s50
      %s67 = sphi 0, %s51
      %s73 = sphi 0, %s75
      %s76 = sphi 0, %s73
      %s77 = sphi 0, %s76
      %s93 = sphi 0, %s77
      %s99 = sphi 0, %s101
      %s102 = sphi 0, %s99
      %s103 = sphi 0, %s102
      %s119 = sphi 0, %s103
      %s125 = sphi 0, %s127
      %s128 = sphi 0, %s125
      %s129 = sphi 0, %s128
      %s145 = sphi 0, %s129
      %s151 = sphi 0, %s153
      %s154 = sphi 0, %s151
      %s155 = sphi 0, %s154
      %s171 = sphi 0, %s155
      %s177 = sphi 0, %s179
      %s180 = sphi 0, %s177
      %s181 = sphi 0, %s180
      %s197 = sphi 0, %s181
      %s203 = sphi 0, %s205
      %s206 = sphi 0, %s203
      %s207 = sphi 0, %s206
      %s223 = sphi 0, %s207
      %s229 = sphi 0, %s231
      %s232 = sphi 0, %s229
      %s233 = sphi 0, %s232
      %s249 = sphi 0, %s233
      %s255 = sphi 0, %s257
      %s258 = sphi 0, %s255
      %s259 = sphi 0, %s258
      %s275 = sphi 0, %s259
      %s279 = sphi 0, %s279
      %s281 = sphi 0, %s279
      %s282 = sphi 0, %s281
      %s296 = sphi 0, %s282
      %s300 = sphi 0, %s300
      %s302 = sphi 0, %s300
      %s303 = sphi 0, %s302
      %s317 = sphi 0, %s303
      %s321 = sphi 0, %s321
      %s323 = sphi 0, %s321
      %s324 = sphi 0, %s323
      %s338 = sphi 0, %s324
      %s342 = sphi 0, %s342
      %s344 = sphi 0, %s342
      %s345 = sphi 0, %s344
      %s359 = sphi 0, %s345
      %s363 = sphi 0, %s363
      %s365 = sphi 0, %s363
      %s366 = sphi 0, %s365
      %s380 = sphi 0, %s366
      %s384 = sphi 0, %s384
      %s386 = sphi 0, %s384
      %s387 = sphi 0, %s386
      %s401 = sphi 0, %s387
      %s405 = sphi 0, %s405
      %s407 = sphi 0, %s405
      %s408 = sphi 0, %s407
      %s422 = sphi 0, %s408
      %s426 = sphi 0, %s426
      %s428 = sphi 0, %s426
      %s429 = sphi 0, %s428
      %s443 = sphi 0, %s429
      %s447 = sphi 0, %s447
      %s449 = sphi 0, %s447
      %s450 = sphi 0, %s449
      %s464 = sphi 0, %s450
      %s470 = sphi 0, %s472
      %s473 = sphi 0, %s470
      %s474 = sphi 0, %s473
      %s490 = sphi 0, %s474
    $region4: #{tpu_custom_call.1} parent=1 // loop_header_branch
      %28 = sbr.rel (%p26) target = $region8
    $region5: #{tpu_custom_call.1} parent=1 // loop_body
      %s30 = ssub.s32 %s25, 1
      %s31 = ssub.s32 %s25, 2
      %s38 = sadd.s32 1, %s33
      %p39 = scmp.ge.s32.totalorder %s38, 4
      %s40 = scalar_select %p39, 0, %s38
      %s41 = sadd.s32 1, %s32
      %s42 = scalar_select %p39, %s41, %s32
      %p43 = scmp.ge.s32.totalorder %s42, 1
      %s44 = scalar_select %p43, 0, %s42
      %s45 = ssub.s32 %s32, %s44
      %p46 = scmp.eq.s32.totalorder %s45, 0
      %s48 = sadd.s32 %s47, 1
      %s49 = scalar_select %p46, %s47, %s48
      %p52 = pneg %p46
      %p53 = scmp.eq.s32.totalorder %s25, 3
      %p54 = por %p52, %p53
      %p55 = scmp.ne.s32.totalorder %s47, %s50
      %p56 = scmp.eq.s32.totalorder %s25, 0
      %p57 = por %p55, %p56
      %p58 = scmp.ne.s32.totalorder %s47, %s50
      %p59 = scmp.eq.s32.totalorder %s30, 3
      %p60 = por %p58, %p59
      %p61 = scmp.ne.s32.totalorder %s50, %s51
      %p62 = scmp.eq.s32.totalorder %s30, 0
      %p63 = por %p61, %p62
      %p64 = scmp.ne.s32.totalorder %s50, %s51
      %p65 = scmp.eq.s32.totalorder %s31, 3
      %p66 = por %p64, %p65
      %p68 = scmp.ne.s32.totalorder %s51, %s67
      %p69 = scmp.eq.s32.totalorder %s31, 0
      %p70 = por %p68, %p69
      %s71 = ssub.s32 %s32, %s44
      %p72 = scmp.eq.s32.totalorder %s71, 0
      %s74 = sadd.s32 %s73, 1
      %s75 = scalar_select %p72, %s73, %s74
      %p78 = pneg %p72
      %p79 = scmp.eq.s32.totalorder %s25, 3
      %p80 = por %p78, %p79
      %p81 = scmp.ne.s32.totalorder %s73, %s76
      %p82 = scmp.eq.s32.totalorder %s25, 0
      %p83 = por %p81, %p82
      %p84 = scmp.ne.s32.totalorder %s73, %s76
      %p85 = scmp.eq.s32.totalorder %s30, 3
      %p86 = por %p84, %p85
      %p87 = scmp.ne.s32.totalorder %s76, %s77
      %p88 = scmp.eq.s32.totalorder %s30, 0
      %p89 = por %p87, %p88
      %p90 = scmp.ne.s32.totalorder %s76, %s77
      %p91 = scmp.eq.s32.totalorder %s31, 3
      %p92 = por %p90, %p91
      %p94 = scmp.ne.s32.totalorder %s77, %s93
      %p95 = scmp.eq.s32.totalorder %s31, 0
      %p96 = por %p94, %p95
      %s97 = ssub.s32 %s33, %s40
      %p98 = scmp.eq.s32.totalorder %s97, 0
      %s100 = sadd.s32 %s99, 1
      %s101 = scalar_select %p98, %s99, %s100
      %p104 = pneg %p98
      %p105 = scmp.eq.s32.totalorder %s25, 3
      %p106 = por %p104, %p105
      %p107 = scmp.ne.s32.totalorder %s99, %s102
      %p108 = scmp.eq.s32.totalorder %s25, 0
      %p109 = por %p107, %p108
      %p110 = scmp.ne.s32.totalorder %s99, %s102
      %p111 = scmp.eq.s32.totalorder %s30, 3
      %p112 = por %p110, %p111
      %p113 = scmp.ne.s32.totalorder %s102, %s103
      %p114 = scmp.eq.s32.totalorder %s30, 0
      %p115 = por %p113, %p114
      %p116 = scmp.ne.s32.totalorder %s102, %s103
      %p117 = scmp.eq.s32.totalorder %s31, 3
      %p118 = por %p116, %p117
      %p120 = scmp.ne.s32.totalorder %s103, %s119
      %p121 = scmp.eq.s32.totalorder %s31, 0
      %p122 = por %p120, %p121
      %s123 = ssub.s32 %s33, %s40
      %p124 = scmp.eq.s32.totalorder %s123, 0
      %s126 = sadd.s32 %s125, 1
      %s127 = scalar_select %p124, %s125, %s126
      %p130 = pneg %p124
      %p131 = scmp.eq.s32.totalorder %s25, 3
      %p132 = por %p130, %p131
      %p133 = scmp.ne.s32.totalorder %s125, %s128
      %p134 = scmp.eq.s32.totalorder %s25, 0
      %p135 = por %p133, %p134
      %p136 = scmp.ne.s32.totalorder %s125, %s128
      %p137 = scmp.eq.s32.totalorder %s30, 3
      %p138 = por %p136, %p137
      %p139 = scmp.ne.s32.totalorder %s128, %s129
      %p140 = scmp.eq.s32.totalorder %s30, 0
      %p141 = por %p139, %p140
      %p142 = scmp.ne.s32.totalorder %s128, %s129
      %p143 = scmp.eq.s32.totalorder %s31, 3
      %p144 = por %p142, %p143
      %p146 = scmp.ne.s32.totalorder %s129, %s145
      %p147 = scmp.eq.s32.totalorder %s31, 0
      %p148 = por %p146, %p147
      %s149 = ssub.s32 %s33, %s40
      %p150 = scmp.eq.s32.totalorder %s149, 0
      %s152 = sadd.s32 %s151, 1
      %s153 = scalar_select %p150, %s151, %s152
      %p156 = pneg %p150
      %p157 = scmp.eq.s32.totalorder %s25, 3
      %p158 = por %p156, %p157
      %p159 = scmp.ne.s32.totalorder %s151, %s154
      %p160 = scmp.eq.s32.totalorder %s25, 0
      %p161 = por %p159, %p160
      %p162 = scmp.ne.s32.totalorder %s151, %s154
      %p163 = scmp.eq.s32.totalorder %s30, 3
      %p164 = por %p162, %p163
      %p165 = scmp.ne.s32.totalorder %s154, %s155
      %p166 = scmp.eq.s32.totalorder %s30, 0
      %p167 = por %p165, %p166
      %p168 = scmp.ne.s32.totalorder %s154, %s155
      %p169 = scmp.eq.s32.totalorder %s31, 3
      %p170 = por %p168, %p169
      %p172 = scmp.ne.s32.totalorder %s155, %s171
      %p173 = scmp.eq.s32.totalorder %s31, 0
      %p174 = por %p172, %p173
      %s175 = ssub.s32 %s33, %s40
      %p176 = scmp.eq.s32.totalorder %s175, 0
      %s178 = sadd.s32 %s177, 1
      %s179 = scalar_select %p176, %s177, %s178
      %p182 = pneg %p176
      %p183 = scmp.eq.s32.totalorder %s25, 3
      %p184 = por %p182, %p183
      %p185 = scmp.ne.s32.totalorder %s177, %s180
      %p186 = scmp.eq.s32.totalorder %s25, 0
      %p187 = por %p185, %p186
      %p188 = scmp.ne.s32.totalorder %s177, %s180
      %p189 = scmp.eq.s32.totalorder %s30, 3
      %p190 = por %p188, %p189
      %p191 = scmp.ne.s32.totalorder %s180, %s181
      %p192 = scmp.eq.s32.totalorder %s30, 0
      %p193 = por %p191, %p192
      %p194 = scmp.ne.s32.totalorder %s180, %s181
      %p195 = scmp.eq.s32.totalorder %s31, 3
      %p196 = por %p194, %p195
      %p198 = scmp.ne.s32.totalorder %s181, %s197
      %p199 = scmp.eq.s32.totalorder %s31, 0
      %p200 = por %p198, %p199
      %s201 = ssub.s32 %s33, %s40
      %p202 = scmp.eq.s32.totalorder %s201, 0
      %s204 = sadd.s32 %s203, 1
      %s205 = scalar_select %p202, %s203, %s204
      %p208 = pneg %p202
      %p209 = scmp.eq.s32.totalorder %s25, 3
      %p210 = por %p208, %p209
      %p211 = scmp.ne.s32.totalorder %s203, %s206
      %p212 = scmp.eq.s32.totalorder %s25, 0
      %p213 = por %p211, %p212
      %p214 = scmp.ne.s32.totalorder %s203, %s206
      %p215 = scmp.eq.s32.totalorder %s30, 3
      %p216 = por %p214, %p215
      %p217 = scmp.ne.s32.totalorder %s206, %s207
      %p218 = scmp.eq.s32.totalorder %s30, 0
      %p219 = por %p217, %p218
      %p220 = scmp.ne.s32.totalorder %s206, %s207
      %p221 = scmp.eq.s32.totalorder %s31, 3
      %p222 = por %p220, %p221
      %p224 = scmp.ne.s32.totalorder %s207, %s223
      %p225 = scmp.eq.s32.totalorder %s31, 0
      %p226 = por %p224, %p225
      %s227 = ssub.s32 %s33, %s40
      %p228 = scmp.eq.s32.totalorder %s227, 0
      %s230 = sadd.s32 %s229, 1
      %s231 = scalar_select %p228, %s229, %s230
      %p234 = pneg %p228
      %p235 = scmp.eq.s32.totalorder %s25, 3
      %p236 = por %p234, %p235
      %p237 = scmp.ne.s32.totalorder %s229, %s232
      %p238 = scmp.eq.s32.totalorder %s25, 0
      %p239 = por %p237, %p238
      %p240 = scmp.ne.s32.totalorder %s229, %s232
      %p241 = scmp.eq.s32.totalorder %s30, 3
      %p242 = por %p240, %p241
      %p243 = scmp.ne.s32.totalorder %s232, %s233
      %p244 = scmp.eq.s32.totalorder %s30, 0
      %p245 = por %p243, %p244
      %p246 = scmp.ne.s32.totalorder %s232, %s233
      %p247 = scmp.eq.s32.totalorder %s31, 3
      %p248 = por %p246, %p247
      %p250 = scmp.ne.s32.totalorder %s233, %s249
      %p251 = scmp.eq.s32.totalorder %s31, 0
      %p252 = por %p250, %p251
      %s253 = ssub.s32 %s33, %s40
      %p254 = scmp.eq.s32.totalorder %s253, 0
      %s256 = sadd.s32 %s255, 1
      %s257 = scalar_select %p254, %s255, %s256
      %p260 = pneg %p254
      %p261 = scmp.eq.s32.totalorder %s25, 3
      %p262 = por %p260, %p261
      %p263 = scmp.ne.s32.totalorder %s255, %s258
      %p264 = scmp.eq.s32.totalorder %s25, 0
      %p265 = por %p263, %p264
      %p266 = scmp.ne.s32.totalorder %s255, %s258
      %p267 = scmp.eq.s32.totalorder %s30, 3
      %p268 = por %p266, %p267
      %p269 = scmp.ne.s32.totalorder %s258, %s259
      %p270 = scmp.eq.s32.totalorder %s30, 0
      %p271 = por %p269, %p270
      %p272 = scmp.ne.s32.totalorder %s258, %s259
      %p273 = scmp.eq.s32.totalorder %s31, 3
      %p274 = por %p272, %p273
      %p276 = scmp.ne.s32.totalorder %s259, %s275
      %p277 = scmp.eq.s32.totalorder %s31, 0
      %p278 = por %p276, %p277
      %s280 = sadd.s32 %s279, 1
      %p283 = scmp.eq.s32.totalorder %s25, 3
      %p284 = scmp.ne.s32.totalorder %s279, %s281
      %p285 = scmp.eq.s32.totalorder %s25, 0
      %p286 = por %p284, %p285
      %p287 = scmp.ne.s32.totalorder %s279, %s281
      %p288 = scmp.eq.s32.totalorder %s30, 3
      %p289 = por %p287, %p288
      %p290 = scmp.ne.s32.totalorder %s281, %s282
      %p291 = scmp.eq.s32.totalorder %s30, 0
      %p292 = por %p290, %p291
      %p293 = scmp.ne.s32.totalorder %s281, %s282
      %p294 = scmp.eq.s32.totalorder %s31, 3
      %p295 = por %p293, %p294
      %p297 = scmp.ne.s32.totalorder %s282, %s296
      %p298 = scmp.eq.s32.totalorder %s31, 0
      %p299 = por %p297, %p298
      %s301 = sadd.s32 %s300, 1
      %p304 = scmp.eq.s32.totalorder %s25, 3
      %p305 = scmp.ne.s32.totalorder %s300, %s302
      %p306 = scmp.eq.s32.totalorder %s25, 0
      %p307 = por %p305, %p306
      %p308 = scmp.ne.s32.totalorder %s300, %s302
      %p309 = scmp.eq.s32.totalorder %s30, 3
      %p310 = por %p308, %p309
      %p311 = scmp.ne.s32.totalorder %s302, %s303
      %p312 = scmp.eq.s32.totalorder %s30, 0
      %p313 = por %p311, %p312
      %p314 = scmp.ne.s32.totalorder %s302, %s303
      %p315 = scmp.eq.s32.totalorder %s31, 3
      %p316 = por %p314, %p315
      %p318 = scmp.ne.s32.totalorder %s303, %s317
      %p319 = scmp.eq.s32.totalorder %s31, 0
      %p320 = por %p318, %p319
      %s322 = sadd.s32 %s321, 1
      %p325 = scmp.eq.s32.totalorder %s25, 3
      %p326 = scmp.ne.s32.totalorder %s321, %s323
      %p327 = scmp.eq.s32.totalorder %s25, 0
      %p328 = por %p326, %p327
      %p329 = scmp.ne.s32.totalorder %s321, %s323
      %p330 = scmp.eq.s32.totalorder %s30, 3
      %p331 = por %p329, %p330
      %p332 = scmp.ne.s32.totalorder %s323, %s324
      %p333 = scmp.eq.s32.totalorder %s30, 0
      %p334 = por %p332, %p333
      %p335 = scmp.ne.s32.totalorder %s323, %s324
      %p336 = scmp.eq.s32.totalorder %s31, 3
      %p337 = por %p335, %p336
      %p339 = scmp.ne.s32.totalorder %s324, %s338
      %p340 = scmp.eq.s32.totalorder %s31, 0
      %p341 = por %p339, %p340
      %s343 = sadd.s32 %s342, 1
      %p346 = scmp.eq.s32.totalorder %s25, 3
      %p347 = scmp.ne.s32.totalorder %s342, %s344
      %p348 = scmp.eq.s32.totalorder %s25, 0
      %p349 = por %p347, %p348
      %p350 = scmp.ne.s32.totalorder %s342, %s344
      %p351 = scmp.eq.s32.totalorder %s30, 3
      %p352 = por %p350, %p351
      %p353 = scmp.ne.s32.totalorder %s344, %s345
      %p354 = scmp.eq.s32.totalorder %s30, 0
      %p355 = por %p353, %p354
      %p356 = scmp.ne.s32.totalorder %s344, %s345
      %p357 = scmp.eq.s32.totalorder %s31, 3
      %p358 = por %p356, %p357
      %p360 = scmp.ne.s32.totalorder %s345, %s359
      %p361 = scmp.eq.s32.totalorder %s31, 0
      %p362 = por %p360, %p361
      %s364 = sadd.s32 %s363, 1
      %p367 = scmp.eq.s32.totalorder %s25, 3
      %p368 = scmp.ne.s32.totalorder %s363, %s365
      %p369 = scmp.eq.s32.totalorder %s25, 0
      %p370 = por %p368, %p369
      %p371 = scmp.ne.s32.totalorder %s363, %s365
      %p372 = scmp.eq.s32.totalorder %s30, 3
      %p373 = por %p371, %p372
      %p374 = scmp.ne.s32.totalorder %s365, %s366
      %p375 = scmp.eq.s32.totalorder %s30, 0
      %p376 = por %p374, %p375
      %p377 = scmp.ne.s32.totalorder %s365, %s366
      %p378 = scmp.eq.s32.totalorder %s31, 3
      %p379 = por %p377, %p378
      %p381 = scmp.ne.s32.totalorder %s366, %s380
      %p382 = scmp.eq.s32.totalorder %s31, 0
      %p383 = por %p381, %p382
      %s385 = sadd.s32 %s384, 1
      %p388 = scmp.eq.s32.totalorder %s25, 3
      %p389 = scmp.ne.s32.totalorder %s384, %s386
      %p390 = scmp.eq.s32.totalorder %s25, 0
      %p391 = por %p389, %p390
      %p392 = scmp.ne.s32.totalorder %s384, %s386
      %p393 = scmp.eq.s32.totalorder %s30, 3
      %p394 = por %p392, %p393
      %p395 = scmp.ne.s32.totalorder %s386, %s387
      %p396 = scmp.eq.s32.totalorder %s30, 0
      %p397 = por %p395, %p396
      %p398 = scmp.ne.s32.totalorder %s386, %s387
      %p399 = scmp.eq.s32.totalorder %s31, 3
      %p400 = por %p398, %p399
      %p402 = scmp.ne.s32.totalorder %s387, %s401
      %p403 = scmp.eq.s32.totalorder %s31, 0
      %p404 = por %p402, %p403
      %s406 = sadd.s32 %s405, 1
      %p409 = scmp.eq.s32.totalorder %s25, 3
      %p410 = scmp.ne.s32.totalorder %s405, %s407
      %p411 = scmp.eq.s32.totalorder %s25, 0
      %p412 = por %p410, %p411
      %p413 = scmp.ne.s32.totalorder %s405, %s407
      %p414 = scmp.eq.s32.totalorder %s30, 3
      %p415 = por %p413, %p414
      %p416 = scmp.ne.s32.totalorder %s407, %s408
      %p417 = scmp.eq.s32.totalorder %s30, 0
      %p418 = por %p416, %p417
      %p419 = scmp.ne.s32.totalorder %s407, %s408
      %p420 = scmp.eq.s32.totalorder %s31, 3
      %p421 = por %p419, %p420
      %p423 = scmp.ne.s32.totalorder %s408, %s422
      %p424 = scmp.eq.s32.totalorder %s31, 0
      %p425 = por %p423, %p424
      %s427 = sadd.s32 %s426, 1
      %p430 = scmp.eq.s32.totalorder %s25, 3
      %p431 = scmp.ne.s32.totalorder %s426, %s428
      %p432 = scmp.eq.s32.totalorder %s25, 0
      %p433 = por %p431, %p432
      %p434 = scmp.ne.s32.totalorder %s426, %s428
      %p435 = scmp.eq.s32.totalorder %s30, 3
      %p436 = por %p434, %p435
      %p437 = scmp.ne.s32.totalorder %s428, %s429
      %p438 = scmp.eq.s32.totalorder %s30, 0
      %p439 = por %p437, %p438
      %p440 = scmp.ne.s32.totalorder %s428, %s429
      %p441 = scmp.eq.s32.totalorder %s31, 3
      %p442 = por %p440, %p441
      %p444 = scmp.ne.s32.totalorder %s429, %s443
      %p445 = scmp.eq.s32.totalorder %s31, 0
      %p446 = por %p444, %p445
      %s448 = sadd.s32 %s447, 1
      %p451 = scmp.eq.s32.totalorder %s25, 3
      %p452 = scmp.ne.s32.totalorder %s447, %s449
      %p453 = scmp.eq.s32.totalorder %s25, 0
      %p454 = por %p452, %p453
      %p455 = scmp.ne.s32.totalorder %s447, %s449
      %p456 = scmp.eq.s32.totalorder %s30, 3
      %p457 = por %p455, %p456
      %p458 = scmp.ne.s32.totalorder %s449, %s450
      %p459 = scmp.eq.s32.totalorder %s30, 0
      %p460 = por %p458, %p459
      %p461 = scmp.ne.s32.totalorder %s449, %s450
      %p462 = scmp.eq.s32.totalorder %s31, 3
      %p463 = por %p461, %p462
      %p465 = scmp.ne.s32.totalorder %s450, %s464
      %p466 = scmp.eq.s32.totalorder %s31, 0
      %p467 = por %p465, %p466
      %s468 = ssub.s32 %s32, %s44
      %p469 = scmp.eq.s32.totalorder %s468, 0
      %s471 = sadd.s32 %s470, 1
      %s472 = scalar_select %p469, %s470, %s471
      %p475 = pneg %p469
      %p476 = scmp.eq.s32.totalorder %s25, 3
      %p477 = por %p475, %p476
      %p478 = scmp.ne.s32.totalorder %s470, %s473
      %p479 = scmp.eq.s32.totalorder %s25, 0
      %p480 = por %p478, %p479
      %p481 = scmp.ne.s32.totalorder %s470, %s473
      %p482 = scmp.eq.s32.totalorder %s30, 3
      %p483 = por %p481, %p482
      %p484 = scmp.ne.s32.totalorder %s473, %s474
      %p485 = scmp.eq.s32.totalorder %s30, 0
      %p486 = por %p484, %p485
      %p487 = scmp.ne.s32.totalorder %s473, %s474
      %p488 = scmp.eq.s32.totalorder %s31, 3
      %p489 = por %p487, %p488
      %p491 = scmp.ne.s32.totalorder %s474, %s490
      %p492 = scmp.eq.s32.totalorder %s31, 0
      %p493 = por %p491, %p492
      %p494 = scmp.le.s32.totalorder 1, %s25
      %p495 = scmp.lt.s32.totalorder %s25, 5
      %p496 = pnand %p494, %p495
      %p497 = pneg %p496
      // Predicated region
      $region9: #{tpu_custom_call.1} parent=5 // pred_check
        _
      $region10: #{tpu_custom_call.1} parent=5 // pred_check_branch
        %499 = sbr.rel (%p496) target = $region12
      $region11: #{tpu_custom_call.1} parent=5 // pred_region
        %s500 = ssub.s32 %s25, 1
        // Predicated region
        $region13: #{tpu_custom_call.1} parent=11 // pred_check
          %p501 = pneg %p63
        $region14: #{tpu_custom_call.1} parent=11 // pred_check_branch
          %503 = sbr.rel (%p501) target = $region16
        $region15: #{tpu_custom_call.1} parent=11 // pred_region
          %s504 = smul.u32 2, %s34
          %p505 = scmp.lt.s32.totalorder %s504, 1
          %s506 = scalar_select %p505, %s504, 1
          %s507 = smul.addr %s506, 8
          %s508 = scalar_lea.vmem %s0, %s507
          %s509 = smul.u32 2, %s34
        $region16: #{tpu_custom_call.1} parent=11 // pred_fallthru
          _
        // Predicated region
        $region17: #{tpu_custom_call.1} parent=11 // pred_check
          %p510 = pneg %p89
        $region18: #{tpu_custom_call.1} parent=11 // pred_check_branch
          %512 = sbr.rel (%p510) target = $region20
        $region19: #{tpu_custom_call.1} parent=11 // pred_region
          %s513 = smul.u32 2, %s34
          %p514 = scmp.lt.s32.totalorder %s513, 1
          %s515 = scalar_select %p514, %s513, 1
          %s516 = smul.addr %s515, 2
          %s517 = smul.addr %s516, 8
          %s518 = scalar_lea.vmem %s1, %s517
          %s519 = smul.u32 2, %s34
        $region20: #{tpu_custom_call.1} parent=11 // pred_fallthru
          _
        // Predicated region
        $region21: #{tpu_custom_call.1} parent=11 // pred_check
          %p520 = pneg %p292
        $region22: #{tpu_custom_call.1} parent=11 // pred_check_branch
          %522 = sbr.rel (%p520) target = $region24
        $region23: #{tpu_custom_call.1} parent=11 // pred_region
          _
        $region24: #{tpu_custom_call.1} parent=11 // pred_fallthru
          _
        // Predicated region
        $region25: #{tpu_custom_call.1} parent=11 // pred_check
          %p523 = pneg %p313
        $region26: #{tpu_custom_call.1} parent=11 // pred_check_branch
          %525 = sbr.rel (%p523) target = $region28
        $region27: #{tpu_custom_call.1} parent=11 // pred_region
          _
        $region28: #{tpu_custom_call.1} parent=11 // pred_fallthru
          _
        // Predicated region
        $region29: #{tpu_custom_call.1} parent=11 // pred_check
          %p526 = pneg %p334
        $region30: #{tpu_custom_call.1} parent=11 // pred_check_branch
          %528 = sbr.rel (%p526) target = $region32
        $region31: #{tpu_custom_call.1} parent=11 // pred_region
          _
        $region32: #{tpu_custom_call.1} parent=11 // pred_fallthru
          _
        // Predicated region
        $region33: #{tpu_custom_call.1} parent=11 // pred_check
          %p529 = pneg %p355
        $region34: #{tpu_custom_call.1} parent=11 // pred_check_branch
          %531 = sbr.rel (%p529) target = $region36
        $region35: #{tpu_custom_call.1} parent=11 // pred_region
          _
        $region36: #{tpu_custom_call.1} parent=11 // pred_fallthru
          _
        // Predicated region
        $region37: #{tpu_custom_call.1} parent=11 // pred_check
          %p532 = pneg %p376
        $region38: #{tpu_custom_call.1} parent=11 // pred_check_branch
          %534 = sbr.rel (%p532) target = $region40
        $region39: #{tpu_custom_call.1} parent=11 // pred_region
          _
        $region40: #{tpu_custom_call.1} parent=11 // pred_fallthru
          _
        // Predicated region
        $region41: #{tpu_custom_call.1} parent=11 // pred_check
          %p535 = pneg %p397
        $region42: #{tpu_custom_call.1} parent=11 // pred_check_branch
          %537 = sbr.rel (%p535) target = $region44
        $region43: #{tpu_custom_call.1} parent=11 // pred_region
          _
        $region44: #{tpu_custom_call.1} parent=11 // pred_fallthru
          _
        // Predicated region
        $region45: #{tpu_custom_call.1} parent=11 // pred_check
          %p538 = pneg %p418
        $region46: #{tpu_custom_call.1} parent=11 // pred_check_branch
          %540 = sbr.rel (%p538) target = $region48
        $region47: #{tpu_custom_call.1} parent=11 // pred_region
          _
        $region48: #{tpu_custom_call.1} parent=11 // pred_fallthru
          _
        // Predicated region
        $region49: #{tpu_custom_call.1} parent=11 // pred_check
          %p541 = pneg %p439
        $region50: #{tpu_custom_call.1} parent=11 // pred_check_branch
          %543 = sbr.rel (%p541) target = $region52
        $region51: #{tpu_custom_call.1} parent=11 // pred_region
          _
        $region52: #{tpu_custom_call.1} parent=11 // pred_fallthru
          _
        // Predicated region
        $region53: #{tpu_custom_call.1} parent=11 // pred_check
          %p544 = pneg %p460
        $region54: #{tpu_custom_call.1} parent=11 // pred_check_branch
          %546 = sbr.rel (%p544) target = $region56
        $region55: #{tpu_custom_call.1} parent=11 // pred_region
          _
        $region56: #{tpu_custom_call.1} parent=11 // pred_fallthru
          _
      $region12: #{tpu_custom_call.1} parent=5 // pred_fallthru
        _
      %p547 = scmp.lt.s32.totalorder %s25, 4
      // Predicated region
      $region57: #{tpu_custom_call.1} parent=5 // pred_check
        %p548 = pneg %p547
      $region58: #{tpu_custom_call.1} parent=5 // pred_check_branch
        %550 = sbr.rel (%p548) target = $region60
      $region59: #{tpu_custom_call.1} parent=5 // pred_region
        // Predicated region
        $region61: #{tpu_custom_call.1} parent=59 // pred_check
          %p551 = pneg %p109
        $region62: #{tpu_custom_call.1} parent=59 // pred_check_branch
          %553 = sbr.rel (%p551) target = $region64
        $region63: #{tpu_custom_call.1} parent=59 // pred_region
          %p554 = scmp.lt.s32.totalorder %s33, 3
          %s555 = scalar_select %p554, %s33, 3
          %s556 = smul.addr %s555, 4
          %s557 = smul.addr %s556, 8
          %s558 = scalar_lea.vmem %s2, %s557
        $region64: #{tpu_custom_call.1} parent=59 // pred_fallthru
          _
        // Predicated region
        $region65: #{tpu_custom_call.1} parent=59 // pred_check
          %p559 = pneg %p135
        $region66: #{tpu_custom_call.1} parent=59 // pred_check_branch
          %561 = sbr.rel (%p559) target = $region68
        $region67: #{tpu_custom_call.1} parent=59 // pred_region
          %p562 = scmp.lt.s32.totalorder %s33, 3
          %s563 = scalar_select %p562, %s33, 3
          %s564 = scalar_lea.vmem %s3, %s563
        $region68: #{tpu_custom_call.1} parent=59 // pred_fallthru
          _
        // Predicated region
        $region69: #{tpu_custom_call.1} parent=59 // pred_check
          %p565 = pneg %p161
        $region70: #{tpu_custom_call.1} parent=59 // pred_check_branch
          %567 = sbr.rel (%p565) target = $region72
        $region71: #{tpu_custom_call.1} parent=59 // pred_region
          %p568 = scmp.lt.s32.totalorder %s33, 3
          %s569 = scalar_select %p568, %s33, 3
          %s570 = smul.addr %s569, 4
          %s571 = smul.addr %s570, 8
          %s572 = scalar_lea.vmem %s4, %s571
        $region72: #{tpu_custom_call.1} parent=59 // pred_fallthru
          _
        // Predicated region
        $region73: #{tpu_custom_call.1} parent=59 // pred_check
          %p573 = pneg %p187
        $region74: #{tpu_custom_call.1} parent=59 // pred_check_branch
          %575 = sbr.rel (%p573) target = $region76
        $region75: #{tpu_custom_call.1} parent=59 // pred_region
          %p576 = scmp.lt.s32.totalorder %s33, 3
          %s577 = scalar_select %p576, %s33, 3
          %s578 = scalar_lea.vmem %s5, %s577
        $region76: #{tpu_custom_call.1} parent=59 // pred_fallthru
          _
        // Predicated region
        $region77: #{tpu_custom_call.1} parent=59 // pred_check
          %p579 = pneg %p213
        $region78: #{tpu_custom_call.1} parent=59 // pred_check_branch
          %581 = sbr.rel (%p579) target = $region80
        $region79: #{tpu_custom_call.1} parent=59 // pred_region
          %p582 = scmp.lt.s32.totalorder %s33, 3
          %s583 = scalar_select %p582, %s33, 3
          %s584 = smul.addr %s583, 4
          %s585 = smul.addr %s584, 8
          %s586 = scalar_lea.vmem %s6, %s585
        $region80: #{tpu_custom_call.1} parent=59 // pred_fallthru
          _
        // Predicated region
        $region81: #{tpu_custom_call.1} parent=59 // pred_check
          %p587 = pneg %p239
        $region82: #{tpu_custom_call.1} parent=59 // pred_check_branch
          %589 = sbr.rel (%p587) target = $region84
        $region83: #{tpu_custom_call.1} parent=59 // pred_region
          %p590 = scmp.lt.s32.totalorder %s33, 3
          %s591 = scalar_select %p590, %s33, 3
          %s592 = scalar_lea.vmem %s7, %s591
        $region84: #{tpu_custom_call.1} parent=59 // pred_fallthru
          _
        // Predicated region
        $region85: #{tpu_custom_call.1} parent=59 // pred_check
          %p593 = pneg %p265
        $region86: #{tpu_custom_call.1} parent=59 // pred_check_branch
          %595 = sbr.rel (%p593) target = $region88
        $region87: #{tpu_custom_call.1} parent=59 // pred_region
          %p596 = scmp.lt.s32.totalorder %s33, 3
          %s597 = scalar_select %p596, %s33, 3
          %s598 = smul.addr %s597, 8
          %s599 = scalar_lea.vmem %s8, %s598
        $region88: #{tpu_custom_call.1} parent=59 // pred_fallthru
          _
      $region60: #{tpu_custom_call.1} parent=5 // pred_fallthru
        _
      %p600 = scmp.le.s32.totalorder 1, %s25
      %p601 = scmp.lt.s32.totalorder %s25, 5
      %p602 = pnand %p600, %p601
      %p603 = pneg %p602
      // Predicated region
      $region89: #{tpu_custom_call.1} parent=5 // pred_check
        _
      $region90: #{tpu_custom_call.1} parent=5 // pred_check_branch
        %605 = sbr.rel (%p602) target = $region92
      $region91: #{tpu_custom_call.1} parent=5 // pred_region
        %s606 = ssub.s32 %s25, 1
        %s607 = smul.u32 2, %s34
        %p608 = scmp.lt.s32.totalorder %s607, 1
        %s609 = scalar_select %p608, %s607, 1
        %s610 = smul.addr %s609, 8
        %s611 = scalar_lea.vmem %s0, %s610
        %p612 = pneg %p63
        %p613 = pneg %p60
        %s614 = smul.u32 2, %s34
        %p615 = scmp.lt.s32.totalorder %s614, 1
        %s616 = scalar_select %p615, %s614, 1
        %s617 = smul.addr %s616, 2
        %s618 = smul.addr %s617, 8
        %s619 = scalar_lea.vmem %s1, %s618
        %p620 = pneg %p89
        %p621 = pneg %p86
        %p622 = scmp.lt.s32.totalorder %s35, 3
        %s623 = scalar_select %p622, %s35, 3
        %s624 = smul.addr %s623, 4
        %s625 = smul.addr %s624, 8
        %s626 = scalar_lea.vmem %s2, %s625
        %p627 = pneg %p115
        %p628 = pneg %p112
        %p629 = scmp.lt.s32.totalorder %s35, 3
        %s630 = scalar_select %p629, %s35, 3
        %s631 = scalar_lea.vmem %s3, %s630
        %p632 = pneg %p141
        %p633 = pneg %p138
        %p634 = scmp.lt.s32.totalorder %s35, 3
        %s635 = scalar_select %p634, %s35, 3
        %s636 = smul.addr %s635, 4
        %s637 = smul.addr %s636, 8
        %s638 = scalar_lea.vmem %s4, %s637
        %p639 = pneg %p167
        %p640 = pneg %p164
        %p641 = scmp.lt.s32.totalorder %s35, 3
        %s642 = scalar_select %p641, %s35, 3
        %s643 = scalar_lea.vmem %s5, %s642
        %p644 = pneg %p193
        %p645 = pneg %p190
        %p646 = scmp.lt.s32.totalorder %s35, 3
        %s647 = scalar_select %p646, %s35, 3
        %s648 = smul.addr %s647, 4
        %s649 = smul.addr %s648, 8
        %s650 = scalar_lea.vmem %s6, %s649
        %p651 = pneg %p219
        %p652 = pneg %p216
        %p653 = scmp.lt.s32.totalorder %s35, 3
        %s654 = scalar_select %p653, %s35, 3
        %s655 = scalar_lea.vmem %s7, %s654
        %p656 = pneg %p245
        %p657 = pneg %p242
        %p658 = scmp.lt.s32.totalorder %s35, 3
        %s659 = scalar_select %p658, %s35, 3
        %s660 = smul.addr %s659, 8
        %s661 = scalar_lea.vmem %s8, %s660
        %p662 = pneg %p271
        %p663 = pneg %p268
        %p664 = pneg %p292
        %p665 = pneg %p289
        %p666 = pneg %p313
        %p667 = pneg %p310
        %p668 = pneg %p334
        %p669 = pneg %p331
        %p670 = pneg %p355
        %p671 = pneg %p352
        %p672 = pneg %p376
        %p673 = pneg %p373
        %p674 = pneg %p397
        %p675 = pneg %p394
        %p676 = pneg %p418
        %p677 = pneg %p415
        %p678 = pneg %p439
        %p679 = pneg %p436
        %p680 = pneg %p460
        %p681 = pneg %p457
        %p682 = pneg %p486
        %p683 = pneg %p483
        %s684 = smul.u32 2, %s34
        %p685 = scmp.lt.s32.totalorder %s684, 1
        %s686 = scalar_select %p685, %s684, 1
        %s687 = smul.addr %s686, 8
        %s688 = scalar_lea.vmem %s0, %s687
        %s689 = smul.u32 2, %s34
        %s690 = smul.u32 2, %s34
        %p691 = scmp.lt.s32.totalorder %s690, 1
        %s692 = scalar_select %p691, %s690, 1
        %s693 = smul.addr %s692, 2
        %s694 = smul.addr %s693, 8
        %s695 = scalar_lea.vmem %s1, %s694
        %s696 = smul.u32 2, %s34
        %p697 = scmp.lt.s32.totalorder %s35, 3
        %s698 = scalar_select %p697, %s35, 3
        %s699 = smul.addr %s698, 4
        %s700 = smul.addr %s699, 8
        %s701 = scalar_lea.vmem %s2, %s700
        %p702 = scmp.lt.s32.totalorder %s35, 3
        %s703 = scalar_select %p702, %s35, 3
        %s704 = scalar_lea.vmem %s3, %s703
        %p705 = scmp.lt.s32.totalorder %s35, 3
        %s706 = scalar_select %p705, %s35, 3
        %s707 = smul.addr %s706, 4
        %s708 = smul.addr %s707, 8
        %s709 = scalar_lea.vmem %s4, %s708
        %p710 = scmp.lt.s32.totalorder %s35, 3
        %s711 = scalar_select %p710, %s35, 3
        %s712 = scalar_lea.vmem %s5, %s711
        %p713 = scmp.lt.s32.totalorder %s35, 3
        %s714 = scalar_select %p713, %s35, 3
        %s715 = smul.addr %s714, 4
        %s716 = smul.addr %s715, 8
        %s717 = scalar_lea.vmem %s6, %s716
        %p718 = scmp.lt.s32.totalorder %s35, 3
        %s719 = scalar_select %p718, %s35, 3
        %s720 = scalar_lea.vmem %s7, %s719
        %p721 = scmp.lt.s32.totalorder %s35, 3
        %s722 = scalar_select %p721, %s35, 3
        %s723 = smul.addr %s722, 8
        %s724 = scalar_lea.vmem %s8, %s723
        %s725 = smul.u32 2, %s34
        %v726 = vld [vmem:[%s688] sm:$0xff]
        %v727 = vld [vmem:[%s688 + $0x8] sm:$0xff]
        %v728 = vld [vmem:[%s695] sm:$0xff]
        %v729 = vld [vmem:[%s695 + $0x8] sm:$0xff]
        %v730 = vld [vmem:[%s695 + $0x10] sm:$0xff]
        %v731 = vld [vmem:[%s695 + $0x18] sm:$0xff]
        %p732 = scmp.eq.s32.totalorder %s35, 0
        // Predicated region
        $region93: #{tpu_custom_call.1} parent=91 // pred_check
          %p733 = pneg %p732
        $region94: #{tpu_custom_call.1} parent=91 // pred_check_branch
          %735 = sbr.rel (%p733) target = $region96
        $region95: #{tpu_custom_call.1} parent=91 // pred_region
          %v736 = vld [vmem:[%s9] sm:$0x1]
          %v738 = vlaneseq
          %v739 = vshrl.u32 %v738, 7
          %v740 = vsub.s32 0, %v739
          %v741 = vrot.slane %v736, %v740
          %v743 = vadd.f32 %v726, %v741
          %v744 = vadd.f32 %v727, %v741
          %vm745 = vcmask 261120
          %746 = vst.msk [vmem:[#allocation2] sm:$0xff] %vm745, %v743
          %747 = vst.msk [vmem:[#allocation2 + $0x8] sm:$0xff] %vm745, %v744
        $region96: #{tpu_custom_call.1} parent=91 // pred_fallthru
          _
        %v748 = vld [vmem:[%s701] sm:$0xff]
        %v749 = vld [vmem:[%s701 + $0x8] sm:$0xff]
        %v750 = vld [vmem:[%s701 + $0x10] sm:$0xff]
        %v751 = vld [vmem:[%s701 + $0x18] sm:$0xff]
        %v752 = vld [vmem:[%s704] sm:$0x1]
        %v754 = vlaneseq
        %v755 = vshrl.u32 %v754, 7
        %v756 = vsub.s32 0, %v755
        %v757 = vrot.slane %v752, %v756
        %vm759 = vcmask 261120
        %v761 = vsel %vm759, %v726, 0
        %v764 = vsel %vm759, %v727, 0
        %766 = vmatprep.subr.mxu0 0.0
        %767 = vmatpush1.msra.mxu0 0.0
        %768 = vmatprep.subr.mxu0 0.0
        %769 = vmatpush1.msra.mxu0 0.0
        %770 = vmatprep.subr.mxu0 0.0
        %771 = vmatpush1.msra.mxu0 0.0
        %772 = vmatprep.subr.mxu0 0.0
        %773 = vmatpush1.msra.mxu0 0.0
        %774 = vmatprep.subr.mxu0 0.0
        %775 = vmatpush1.msra.mxu0 0.0
        %776 = vmatprep.subr.mxu0 0.0
        %777 = vmatpush1.msra.mxu0 0.0
        %778 = vmatprep.subr.mxu0 0.0
        %779 = vmatpush1.msra.mxu0 0.0
        %780 = vmatprep.subr.mxu0 0.0
        %781 = vmatpush1.msra.mxu0 0.0
        %782 = vmatprep.subr.mxu0 0.0
        %783 = vmatpush1.msra.mxu0 0.0
        %784 = vmatprep.subr.mxu0 0.0
        %785 = vmatpush1.msra.mxu0 0.0
        %786 = vmatprep.subr.mxu0 0.0
        %787 = vmatpush1.msra.mxu0 0.0
        %788 = vmatprep.subr.mxu0 0.0
        %789 = vmatpush1.msra.mxu0 0.0
        %790 = vmatprep.subr.mxu0 0.0
        %791 = vmatpush1.msra.mxu0 %v751
        %792 = vmatprep.subr.mxu0 0.0
        %793 = vmatpush1.msra.mxu0 %v750
        %794 = vmatprep.subr.mxu0 0.0
        %795 = vmatpush1.msra.mxu0 %v749
        %796 = vmatprep.subr.mxu0 0.0
        %797 = vmatpush1.msra.mxu0 %v748
        %798 = vmatprep.subr.mxu0 0.0
        %799 = vmatpush2.msra.mxu0 0.0
        %800 = vmatprep.subr.mxu0 0.0
        %801 = vmatpush2.msra.mxu0 0.0
        %802 = vmatprep.subr.mxu0 0.0
        %803 = vmatpush2.msra.mxu0 0.0
        %804 = vmatprep.subr.mxu0 0.0
        %805 = vmatpush2.msra.mxu0 0.0
        %806 = vmatprep.subr.mxu0 0.0
        %807 = vmatpush2.msra.mxu0 0.0
        %808 = vmatprep.subr.mxu0 0.0
        %809 = vmatpush2.msra.mxu0 0.0
        %810 = vmatprep.subr.mxu0 0.0
        %811 = vmatpush2.msra.mxu0 0.0
        %812 = vmatprep.subr.mxu0 0.0
        %813 = vmatpush2.msra.mxu0 0.0
        %814 = vmatprep.subr.mxu0 0.0
        %815 = vmatpush2.msra.mxu0 0.0
        %816 = vmatprep.subr.mxu0 0.0
        %817 = vmatpush2.msra.mxu0 0.0
        %818 = vmatprep.subr.mxu0 0.0
        %819 = vmatpush2.msra.mxu0 0.0
        %820 = vmatprep.subr.mxu0 0.0
        %821 = vmatpush2.msra.mxu0 0.0
        %822 = vmatprep.subr.mxu0 0.0
        %823 = vmatpush2.msra.mxu0 0.0
        %824 = vmatprep.subr.mxu0 0.0
        %825 = vmatpush2.msra.mxu0 0.0
        %826 = vmatprep.subr.mxu0 0.0
        %827 = vmatpush2.msra.mxu0 0.0
        %828 = vmatprep.subr.mxu0 0.0
        %829 = vmatpush2.msra.mxu0 0.0
        %830 = vmatprep.mubr.f32.mxu0 0.0
        %831 = vmatmul.mubr.f32.gmra.mxu0 %v761
        %v832 = vpop.f32.mrf.mxu0
        %v833 = vadd.f32 %v757, %v832
        %v834 = vpop.f32.mrf.mxu0
        %835 = vmatprep.mubr.f32.mxu0 0.0
        %836 = vmatmul.mubr.f32.gmra.mxu0 %v764
        %v837 = vpop.f32.mrf.mxu0
        %v838 = vadd.f32 %v757, %v837
        %v839 = vpop.f32.mrf.mxu0
        %840 = vdwg.mxu0
        %v841 = vld [vmem:[%s709] sm:$0xff]
        %v842 = vld [vmem:[%s709 + $0x8] sm:$0xff]
        %v843 = vld [vmem:[%s709 + $0x10] sm:$0xff]
        %v844 = vld [vmem:[%s709 + $0x18] sm:$0xff]
        %v845 = vld [vmem:[%s712] sm:$0x1]
        %v847 = vlaneseq
        %v848 = vshrl.u32 %v847, 7
        %v849 = vsub.s32 0, %v848
        %v850 = vrot.slane %v845, %v849
        %v853 = vsel %vm759, %v728, 0
        %v856 = vsel %vm759, %v729, 0
        %v859 = vsel %vm759, %v730, 0
        %v862 = vsel %vm759, %v731, 0
        %864 = vmatprep.subr.mxu0 0.0
        %865 = vmatpush1.msra.mxu0 0.0
        %866 = vmatprep.subr.mxu0 0.0
        %867 = vmatpush1.msra.mxu0 0.0
        %868 = vmatprep.subr.mxu0 0.0
        %869 = vmatpush1.msra.mxu0 0.0
        %870 = vmatprep.subr.mxu0 0.0
        %871 = vmatpush1.msra.mxu0 0.0
        %872 = vmatprep.subr.mxu0 0.0
        %873 = vmatpush1.msra.mxu0 0.0
        %874 = vmatprep.subr.mxu0 0.0
        %875 = vmatpush1.msra.mxu0 0.0
        %876 = vmatprep.subr.mxu0 0.0
        %877 = vmatpush1.msra.mxu0 0.0
        %878 = vmatprep.subr.mxu0 0.0
        %879 = vmatpush1.msra.mxu0 0.0
        %880 = vmatprep.subr.mxu0 0.0
        %881 = vmatpush1.msra.mxu0 0.0
        %882 = vmatprep.subr.mxu0 0.0
        %883 = vmatpush1.msra.mxu0 0.0
        %884 = vmatprep.subr.mxu0 0.0
        %885 = vmatpush1.msra.mxu0 0.0
        %886 = vmatprep.subr.mxu0 0.0
        %887 = vmatpush1.msra.mxu0 0.0
        %888 = vmatprep.subr.mxu0 0.0
        %889 = vmatpush1.msra.mxu0 %v844
        %890 = vmatprep.subr.mxu0 0.0
        %891 = vmatpush1.msra.mxu0 %v843
        %892 = vmatprep.subr.mxu0 0.0
        %893 = vmatpush1.msra.mxu0 %v842
        %894 = vmatprep.subr.mxu0 0.0
        %895 = vmatpush1.msra.mxu0 %v841
        %896 = vmatprep.subr.mxu0 0.0
        %897 = vmatpush2.msra.mxu0 0.0
        %898 = vmatprep.subr.mxu0 0.0
        %899 = vmatpush2.msra.mxu0 0.0
        %900 = vmatprep.subr.mxu0 0.0
        %901 = vmatpush2.msra.mxu0 0.0
        %902 = vmatprep.subr.mxu0 0.0
        %903 = vmatpush2.msra.mxu0 0.0
        %904 = vmatprep.subr.mxu0 0.0
        %905 = vmatpush2.msra.mxu0 0.0
        %906 = vmatprep.subr.mxu0 0.0
        %907 = vmatpush2.msra.mxu0 0.0
        %908 = vmatprep.subr.mxu0 0.0
        %909 = vmatpush2.msra.mxu0 0.0
        %910 = vmatprep.subr.mxu0 0.0
        %911 = vmatpush2.msra.mxu0 0.0
        %912 = vmatprep.subr.mxu0 0.0
        %913 = vmatpush2.msra.mxu0 0.0
        %914 = vmatprep.subr.mxu0 0.0
        %915 = vmatpush2.msra.mxu0 0.0
        %916 = vmatprep.subr.mxu0 0.0
        %917 = vmatpush2.msra.mxu0 0.0
        %918 = vmatprep.subr.mxu0 0.0
        %919 = vmatpush2.msra.mxu0 0.0
        %920 = vmatprep.subr.mxu0 0.0
        %921 = vmatpush2.msra.mxu0 0.0
        %922 = vmatprep.subr.mxu0 0.0
        %923 = vmatpush2.msra.mxu0 0.0
        %924 = vmatprep.subr.mxu0 0.0
        %925 = vmatpush2.msra.mxu0 0.0
        %926 = vmatprep.subr.mxu0 0.0
        %927 = vmatpush2.msra.mxu0 0.0
        %928 = vmatprep.mubr.f32.mxu0 0.0
        %929 = vmatmul.mubr.f32.gmra.mxu0 %v853
        %v930 = vpop.f32.mrf.mxu0
        %v931 = vadd.f32 %v850, %v930
        %v932 = vpop.f32.mrf.mxu0
        %933 = vmatprep.mubr.f32.mxu0 0.0
        %934 = vmatmul.mubr.f32.gmra.mxu0 %v856
        %v935 = vpop.f32.mrf.mxu0
        %v936 = vadd.f32 %v850, %v935
        %v937 = vpop.f32.mrf.mxu0
        %938 = vmatprep.mubr.f32.mxu0 0.0
        %939 = vmatmul.mubr.f32.gmra.mxu0 %v859
        %v940 = vpop.f32.mrf.mxu0
        %v941 = vadd.f32 %v850, %v940
        %v942 = vpop.f32.mrf.mxu0
        %943 = vmatprep.mubr.f32.mxu0 0.0
        %944 = vmatmul.mubr.f32.gmra.mxu0 %v862
        %v945 = vpop.f32.mrf.mxu0
        %v946 = vadd.f32 %v850, %v945
        %v947 = vpop.f32.mrf.mxu0
        %948 = vdwg.mxu0
        %v949 = vld [vmem:[%s717] sm:$0xff]
        %v950 = vld [vmem:[%s717 + $0x8] sm:$0xff]
        %v951 = vld [vmem:[%s717 + $0x10] sm:$0xff]
        %v952 = vld [vmem:[%s717 + $0x18] sm:$0xff]
        %v953 = vld [vmem:[%s720] sm:$0x1]
        %v955 = vlaneseq
        %v956 = vshrl.u32 %v955, 7
        %v957 = vsub.s32 0, %v956
        %v958 = vrot.slane %v953, %v957
        %960 = vmatprep.subr.mxu0 0.0
        %961 = vmatpush1.msra.mxu0 0.0
        %962 = vmatprep.subr.mxu0 0.0
        %963 = vmatpush1.msra.mxu0 0.0
        %964 = vmatprep.subr.mxu0 0.0
        %965 = vmatpush1.msra.mxu0 0.0
        %966 = vmatprep.subr.mxu0 0.0
        %967 = vmatpush1.msra.mxu0 0.0
        %968 = vmatprep.subr.mxu0 0.0
        %969 = vmatpush1.msra.mxu0 0.0
        %970 = vmatprep.subr.mxu0 0.0
        %971 = vmatpush1.msra.mxu0 0.0
        %972 = vmatprep.subr.mxu0 0.0
        %973 = vmatpush1.msra.mxu0 0.0
        %974 = vmatprep.subr.mxu0 0.0
        %975 = vmatpush1.msra.mxu0 0.0
        %976 = vmatprep.subr.mxu0 0.0
        %977 = vmatpush1.msra.mxu0 0.0
        %978 = vmatprep.subr.mxu0 0.0
        %979 = vmatpush1.msra.mxu0 0.0
        %980 = vmatprep.subr.mxu0 0.0
        %981 = vmatpush1.msra.mxu0 0.0
        %982 = vmatprep.subr.mxu0 0.0
        %983 = vmatpush1.msra.mxu0 0.0
        %984 = vmatprep.subr.mxu0 0.0
        %985 = vmatpush1.msra.mxu0 %v952
        %986 = vmatprep.subr.mxu0 0.0
        %987 = vmatpush1.msra.mxu0 %v951
        %988 = vmatprep.subr.mxu0 0.0
        %989 = vmatpush1.msra.mxu0 %v950
        %990 = vmatprep.subr.mxu0 0.0
        %991 = vmatpush1.msra.mxu0 %v949
        %992 = vmatprep.subr.mxu0 0.0
        %993 = vmatpush2.msra.mxu0 0.0
        %994 = vmatprep.subr.mxu0 0.0
        %995 = vmatpush2.msra.mxu0 0.0
        %996 = vmatprep.subr.mxu0 0.0
        %997 = vmatpush2.msra.mxu0 0.0
        %998 = vmatprep.subr.mxu0 0.0
        %999 = vmatpush2.msra.mxu0 0.0
        %1000 = vmatprep.subr.mxu0 0.0
        %1001 = vmatpush2.msra.mxu0 0.0
        %1002 = vmatprep.subr.mxu0 0.0
        %1003 = vmatpush2.msra.mxu0 0.0
        %1004 = vmatprep.subr.mxu0 0.0
        %1005 = vmatpush2.msra.mxu0 0.0
        %1006 = vmatprep.subr.mxu0 0.0
        %1007 = vmatpush2.msra.mxu0 0.0
        %1008 = vmatprep.subr.mxu0 0.0
        %1009 = vmatpush2.msra.mxu0 0.0
        %1010 = vmatprep.subr.mxu0 0.0
        %1011 = vmatpush2.msra.mxu0 0.0
        %1012 = vmatprep.subr.mxu0 0.0
        %1013 = vmatpush2.msra.mxu0 0.0
        %1014 = vmatprep.subr.mxu0 0.0
        %1015 = vmatpush2.msra.mxu0 0.0
        %1016 = vmatprep.subr.mxu0 0.0
        %1017 = vmatpush2.msra.mxu0 0.0
        %1018 = vmatprep.subr.mxu0 0.0
        %1019 = vmatpush2.msra.mxu0 0.0
        %1020 = vmatprep.subr.mxu0 0.0
        %1021 = vmatpush2.msra.mxu0 0.0
        %1022 = vmatprep.subr.mxu0 0.0
        %1023 = vmatpush2.msra.mxu0 0.0
        %1024 = vmatprep.mubr.f32.mxu0 0.0
        %1025 = vmatmul.mubr.f32.gmra.mxu0 %v853
        %v1026 = vpop.f32.mrf.mxu0
        %v1027 = vadd.f32 %v958, %v1026
        %v1028 = vpop.f32.mrf.mxu0
        %1029 = vmatprep.mubr.f32.mxu0 0.0
        %1030 = vmatmul.mubr.f32.gmra.mxu0 %v856
        %v1031 = vpop.f32.mrf.mxu0
        %v1032 = vadd.f32 %v958, %v1031
        %v1033 = vpop.f32.mrf.mxu0
        %1034 = vmatprep.mubr.f32.mxu0 0.0
        %1035 = vmatmul.mubr.f32.gmra.mxu0 %v859
        %v1036 = vpop.f32.mrf.mxu0
        %v1037 = vadd.f32 %v958, %v1036
        %v1038 = vpop.f32.mrf.mxu0
        %1039 = vmatprep.mubr.f32.mxu0 0.0
        %1040 = vmatmul.mubr.f32.gmra.mxu0 %v862
        %v1041 = vpop.f32.mrf.mxu0
        %v1042 = vadd.f32 %v958, %v1041
        %v1043 = vpop.f32.mrf.mxu0
        %1044 = vdwg.mxu0
        %vm1045 = vcmask 64512
        %v1047 = vsel %vm1045, %v833, 0
        %v1050 = vsel %vm1045, %v931, 0
        %v1053 = vsel %vm1045, %v936, 0
        %1055 = vmatprep.subr.mxu0 0.0
        %1056 = vmatpush1.xpose.msra.mxu0 0.0
        %1057 = vmatprep.subr.mxu0 0.0
        %1058 = vmatpush1.xpose.msra.mxu0 0.0
        %1059 = vmatprep.subr.mxu0 0.0
        %1060 = vmatpush1.xpose.msra.mxu0 0.0
        %1061 = vmatprep.subr.mxu0 0.0
        %1062 = vmatpush1.xpose.msra.mxu0 0.0
        %1063 = vmatprep.subr.mxu0 0.0
        %1064 = vmatpush1.xpose.msra.mxu0 0.0
        %1065 = vmatprep.subr.mxu0 0.0
        %1066 = vmatpush1.xpose.msra.mxu0 0.0
        %1067 = vmatprep.subr.mxu0 0.0
        %1068 = vmatpush1.xpose.msra.mxu0 0.0
        %1069 = vmatprep.subr.mxu0 0.0
        %1070 = vmatpush1.xpose.msra.mxu0 0.0
        %1071 = vmatprep.subr.mxu0 0.0
        %1072 = vmatpush1.xpose.msra.mxu0 0.0
        %1073 = vmatprep.subr.mxu0 0.0
        %1074 = vmatpush1.xpose.msra.mxu0 0.0
        %1075 = vmatprep.subr.mxu0 0.0
        %1076 = vmatpush1.xpose.msra.mxu0 0.0
        %1077 = vmatprep.subr.mxu0 0.0
        %1078 = vmatpush1.xpose.msra.mxu0 0.0
        %1079 = vmatprep.subr.mxu0 0.0
        %1080 = vmatpush1.xpose.msra.mxu0 0.0
        %1081 = vmatprep.subr.mxu0 0.0
        %1082 = vmatpush1.xpose.msra.mxu0 0.0
        %1083 = vmatprep.subr.mxu0 0.0
        %1084 = vmatpush1.xpose.msra.mxu0 %v1053
        %1085 = vmatprep.subr.mxu0 0.0
        %1086 = vmatpush1.xpose.msra.mxu0 %v1050
        %1087 = vmatprep.subr.mxu0 0.0
        %1088 = vmatpush2.xpose.msra.mxu0 0.0
        %1089 = vmatprep.subr.mxu0 0.0
        %1090 = vmatpush2.xpose.msra.mxu0 0.0
        %1091 = vmatprep.subr.mxu0 0.0
        %1092 = vmatpush2.xpose.msra.mxu0 0.0
        %1093 = vmatprep.subr.mxu0 0.0
        %1094 = vmatpush2.xpose.msra.mxu0 0.0
        %1095 = vmatprep.subr.mxu0 0.0
        %1096 = vmatpush2.xpose.msra.mxu0 0.0
        %1097 = vmatprep.subr.mxu0 0.0
        %1098 = vmatpush2.xpose.msra.mxu0 0.0
        %1099 = vmatprep.subr.mxu0 0.0
        %1100 = vmatpush2.xpose.msra.mxu0 0.0
        %1101 = vmatprep.subr.mxu0 0.0
        %1102 = vmatpush2.xpose.msra.mxu0 0.0
        %1103 = vmatprep.subr.mxu0 0.0
        %1104 = vmatpush2.xpose.msra.mxu0 0.0
        %1105 = vmatprep.subr.mxu0 0.0
        %1106 = vmatpush2.xpose.msra.mxu0 0.0
        %1107 = vmatprep.subr.mxu0 0.0
        %1108 = vmatpush2.xpose.msra.mxu0 0.0
        %1109 = vmatprep.subr.mxu0 0.0
        %1110 = vmatpush2.xpose.msra.mxu0 0.0
        %1111 = vmatprep.subr.mxu0 0.0
        %1112 = vmatpush2.xpose.msra.mxu0 0.0
        %1113 = vmatprep.subr.mxu0 0.0
        %1114 = vmatpush2.xpose.msra.mxu0 0.0
        %1115 = vmatprep.subr.mxu0 0.0
        %1116 = vmatpush2.xpose.msra.mxu0 0.0
        %1117 = vmatprep.subr.mxu0 0.0
        %1118 = vmatpush2.xpose.msra.mxu0 0.0
        %1119 = vmatprep.mubr.f32.mxu0 0.0
        %1120 = vmatmul.mubr.f32.gmra.mxu0 %v1047
        %v1121 = vpop.f32.mrf.mxu0
        %v1122 = vadd.f32 0.0, %v1121
        %v1123 = vpop.f32.mrf.mxu0
        %1124 = vdwg.mxu0
        %v1126 = vsel %vm1045, %v838, 0
        %v1129 = vsel %vm1045, %v941, 0
        %v1132 = vsel %vm1045, %v946, 0
        %1134 = vmatprep.subr.mxu0 0.0
        %1135 = vmatpush1.xpose.msra.mxu0 0.0
        %1136 = vmatprep.subr.mxu0 0.0
        %1137 = vmatpush1.xpose.msra.mxu0 0.0
        %1138 = vmatprep.subr.mxu0 0.0
        %1139 = vmatpush1.xpose.msra.mxu0 0.0
        %1140 = vmatprep.subr.mxu0 0.0
        %1141 = vmatpush1.xpose.msra.mxu0 0.0
        %1142 = vmatprep.subr.mxu0 0.0
        %1143 = vmatpush1.xpose.msra.mxu0 0.0
        %1144 = vmatprep.subr.mxu0 0.0
        %1145 = vmatpush1.xpose.msra.mxu0 0.0
        %1146 = vmatprep.subr.mxu0 0.0
        %1147 = vmatpush1.xpose.msra.mxu0 0.0
        %1148 = vmatprep.subr.mxu0 0.0
        %1149 = vmatpush1.xpose.msra.mxu0 0.0
        %1150 = vmatprep.subr.mxu0 0.0
        %1151 = vmatpush1.xpose.msra.mxu0 0.0
        %1152 = vmatprep.subr.mxu0 0.0
        %1153 = vmatpush1.xpose.msra.mxu0 0.0
        %1154 = vmatprep.subr.mxu0 0.0
        %1155 = vmatpush1.xpose.msra.mxu0 0.0
        %1156 = vmatprep.subr.mxu0 0.0
        %1157 = vmatpush1.xpose.msra.mxu0 0.0
        %1158 = vmatprep.subr.mxu0 0.0
        %1159 = vmatpush1.xpose.msra.mxu0 0.0
        %1160 = vmatprep.subr.mxu0 0.0
        %1161 = vmatpush1.xpose.msra.mxu0 0.0
        %1162 = vmatprep.subr.mxu0 0.0
        %1163 = vmatpush1.xpose.msra.mxu0 %v1132
        %1164 = vmatprep.subr.mxu0 0.0
        %1165 = vmatpush1.xpose.msra.mxu0 %v1129
        %1166 = vmatprep.subr.mxu0 0.0
        %1167 = vmatpush2.xpose.msra.mxu0 0.0
        %1168 = vmatprep.subr.mxu0 0.0
        %1169 = vmatpush2.xpose.msra.mxu0 0.0
        %1170 = vmatprep.subr.mxu0 0.0
        %1171 = vmatpush2.xpose.msra.mxu0 0.0
        %1172 = vmatprep.subr.mxu0 0.0
        %1173 = vmatpush2.xpose.msra.mxu0 0.0
        %1174 = vmatprep.subr.mxu0 0.0
        %1175 = vmatpush2.xpose.msra.mxu0 0.0
        %1176 = vmatprep.subr.mxu0 0.0
        %1177 = vmatpush2.xpose.msra.mxu0 0.0
        %1178 = vmatprep.subr.mxu0 0.0
        %1179 = vmatpush2.xpose.msra.mxu0 0.0
        %1180 = vmatprep.subr.mxu0 0.0
        %1181 = vmatpush2.xpose.msra.mxu0 0.0
        %1182 = vmatprep.subr.mxu0 0.0
        %1183 = vmatpush2.xpose.msra.mxu0 0.0
        %1184 = vmatprep.subr.mxu0 0.0
        %1185 = vmatpush2.xpose.msra.mxu0 0.0
        %1186 = vmatprep.subr.mxu0 0.0
        %1187 = vmatpush2.xpose.msra.mxu0 0.0
        %1188 = vmatprep.subr.mxu0 0.0
        %1189 = vmatpush2.xpose.msra.mxu0 0.0
        %1190 = vmatprep.subr.mxu0 0.0
        %1191 = vmatpush2.xpose.msra.mxu0 0.0
        %1192 = vmatprep.subr.mxu0 0.0
        %1193 = vmatpush2.xpose.msra.mxu0 0.0
        %1194 = vmatprep.subr.mxu0 0.0
        %1195 = vmatpush2.xpose.msra.mxu0 0.0
        %1196 = vmatprep.subr.mxu0 0.0
        %1197 = vmatpush2.xpose.msra.mxu0 0.0
        %1198 = vmatprep.mubr.f32.mxu0 0.0
        %1199 = vmatmul.mubr.f32.gmra.mxu0 %v1126
        %v1200 = vpop.f32.mrf.mxu0
        %v1201 = vadd.f32 0.0, %v1200
        %v1202 = vpop.f32.mrf.mxu0
        %1203 = vdwg.mxu0
        %vm1204 = vcmask 130048
        %v1205 = vsel %vm1204, %v1122, -inf
        %1206 = vmax.xlane.f32.xlu0 %v1205
        %v1207 = vpop.xlane.xlu0 %1206
        %v1208 = vsel %vm1204, %v1201, -inf
        %1209 = vmax.xlane.f32.xlu0 %v1208
        %v1210 = vpop.xlane.xlu0 %1209
        %v1211 = vsub.f32 %v1122, %v1207
        %v1212 = vsub.f32 %v1201, %v1210
        %v1213 = vmul.f32 %v1211, 1.442695
        %v1214 = vpow.pop %v1213
        %v1215 = vmul.f32 %v1212, 1.442695
        %v1216 = vpow.pop %v1215
        %v1217 = vsel %vm1204, %v1214, 0.0
        %1218 = vadd.xlane.f32.xlu0 %v1217
        %v1219 = vpop.xlane.xlu0 %1218
        %v1220 = vsel %vm1204, %v1216, 0.0
        %1221 = vadd.xlane.f32.xlu0 %v1220
        %v1222 = vpop.xlane.xlu0 %1221
        %v1224 = vsel %vm1204, %v1214, 0
        %1226 = vmatprep.subr.mxu0 0.0
        %1227 = vmatpush1.msra.mxu0 0.0
        %1228 = vmatprep.subr.mxu0 0.0
        %1229 = vmatpush1.msra.mxu0 0.0
        %1230 = vmatprep.subr.mxu0 0.0
        %1231 = vmatpush1.msra.mxu0 0.0
        %1232 = vmatprep.subr.mxu0 0.0
        %1233 = vmatpush1.msra.mxu0 0.0
        %1234 = vmatprep.subr.mxu0 0.0
        %1235 = vmatpush1.msra.mxu0 0.0
        %1236 = vmatprep.subr.mxu0 0.0
        %1237 = vmatpush1.msra.mxu0 0.0
        %1238 = vmatprep.subr.mxu0 0.0
        %1239 = vmatpush1.msra.mxu0 0.0
        %1240 = vmatprep.subr.mxu0 0.0
        %1241 = vmatpush1.msra.mxu0 0.0
        %1242 = vmatprep.subr.mxu0 0.0
        %1243 = vmatpush1.msra.mxu0 0.0
        %1244 = vmatprep.subr.mxu0 0.0
        %1245 = vmatpush1.msra.mxu0 0.0
        %1246 = vmatprep.subr.mxu0 0.0
        %1247 = vmatpush1.msra.mxu0 0.0
        %1248 = vmatprep.subr.mxu0 0.0
        %1249 = vmatpush1.msra.mxu0 0.0
        %1250 = vmatprep.subr.mxu0 0.0
        %1251 = vmatpush1.msra.mxu0 0.0
        %1252 = vmatprep.subr.mxu0 0.0
        %1253 = vmatpush1.msra.mxu0 0.0
        %1254 = vmatprep.subr.mxu0 0.0
        %1255 = vmatpush1.msra.mxu0 %v1032
        %1256 = vmatprep.subr.mxu0 0.0
        %1257 = vmatpush1.msra.mxu0 %v1027
        %1258 = vmatprep.subr.mxu0 0.0
        %1259 = vmatpush2.msra.mxu0 0.0
        %1260 = vmatprep.subr.mxu0 0.0
        %1261 = vmatpush2.msra.mxu0 0.0
        %1262 = vmatprep.subr.mxu0 0.0
        %1263 = vmatpush2.msra.mxu0 0.0
        %1264 = vmatprep.subr.mxu0 0.0
        %1265 = vmatpush2.msra.mxu0 0.0
        %1266 = vmatprep.subr.mxu0 0.0
        %1267 = vmatpush2.msra.mxu0 0.0
        %1268 = vmatprep.subr.mxu0 0.0
        %1269 = vmatpush2.msra.mxu0 0.0
        %1270 = vmatprep.subr.mxu0 0.0
        %1271 = vmatpush2.msra.mxu0 0.0
        %1272 = vmatprep.subr.mxu0 0.0
        %1273 = vmatpush2.msra.mxu0 0.0
        %1274 = vmatprep.subr.mxu0 0.0
        %1275 = vmatpush2.msra.mxu0 0.0
        %1276 = vmatprep.subr.mxu0 0.0
        %1277 = vmatpush2.msra.mxu0 0.0
        %1278 = vmatprep.subr.mxu0 0.0
        %1279 = vmatpush2.msra.mxu0 0.0
        %1280 = vmatprep.subr.mxu0 0.0
        %1281 = vmatpush2.msra.mxu0 0.0
        %1282 = vmatprep.subr.mxu0 0.0
        %1283 = vmatpush2.msra.mxu0 0.0
        %1284 = vmatprep.subr.mxu0 0.0
        %1285 = vmatpush2.msra.mxu0 0.0
        %1286 = vmatprep.subr.mxu0 0.0
        %1287 = vmatpush2.msra.mxu0 0.0
        %1288 = vmatprep.subr.mxu0 0.0
        %1289 = vmatpush2.msra.mxu0 0.0
        %1290 = vmatprep.mubr.f32.mxu0 0.0
        %1291 = vmatmul.mubr.f32.gmra.mxu0 %v1224
        %v1292 = vpop.f32.mrf.mxu0
        %v1293 = vadd.f32 0.0, %v1292
        %v1294 = vpop.f32.mrf.mxu0
        %1295 = vdwg.mxu0
        %v1297 = vsel %vm1204, %v1216, 0
        %1299 = vmatprep.subr.mxu0 0.0
        %1300 = vmatpush1.msra.mxu0 0.0
        %1301 = vmatprep.subr.mxu0 0.0
        %1302 = vmatpush1.msra.mxu0 0.0
        %1303 = vmatprep.subr.mxu0 0.0
        %1304 = vmatpush1.msra.mxu0 0.0
        %1305 = vmatprep.subr.mxu0 0.0
        %1306 = vmatpush1.msra.mxu0 0.0
        %1307 = vmatprep.subr.mxu0 0.0
        %1308 = vmatpush1.msra.mxu0 0.0
        %1309 = vmatprep.subr.mxu0 0.0
        %1310 = vmatpush1.msra.mxu0 0.0
        %1311 = vmatprep.subr.mxu0 0.0
        %1312 = vmatpush1.msra.mxu0 0.0
        %1313 = vmatprep.subr.mxu0 0.0
        %1314 = vmatpush1.msra.mxu0 0.0
        %1315 = vmatprep.subr.mxu0 0.0
        %1316 = vmatpush1.msra.mxu0 0.0
        %1317 = vmatprep.subr.mxu0 0.0
        %1318 = vmatpush1.msra.mxu0 0.0
        %1319 = vmatprep.subr.mxu0 0.0
        %1320 = vmatpush1.msra.mxu0 0.0
        %1321 = vmatprep.subr.mxu0 0.0
        %1322 = vmatpush1.msra.mxu0 0.0
        %1323 = vmatprep.subr.mxu0 0.0
        %1324 = vmatpush1.msra.mxu0 0.0
        %1325 = vmatprep.subr.mxu0 0.0
        %1326 = vmatpush1.msra.mxu0 0.0
        %1327 = vmatprep.subr.mxu0 0.0
        %1328 = vmatpush1.msra.mxu0 %v1042
        %1329 = vmatprep.subr.mxu0 0.0
        %1330 = vmatpush1.msra.mxu0 %v1037
        %1331 = vmatprep.subr.mxu0 0.0
        %1332 = vmatpush2.msra.mxu0 0.0
        %1333 = vmatprep.subr.mxu0 0.0
        %1334 = vmatpush2.msra.mxu0 0.0
        %1335 = vmatprep.subr.mxu0 0.0
        %1336 = vmatpush2.msra.mxu0 0.0
        %1337 = vmatprep.subr.mxu0 0.0
        %1338 = vmatpush2.msra.mxu0 0.0
        %1339 = vmatprep.subr.mxu0 0.0
        %1340 = vmatpush2.msra.mxu0 0.0
        %1341 = vmatprep.subr.mxu0 0.0
        %1342 = vmatpush2.msra.mxu0 0.0
        %1343 = vmatprep.subr.mxu0 0.0
        %1344 = vmatpush2.msra.mxu0 0.0
        %1345 = vmatprep.subr.mxu0 0.0
        %1346 = vmatpush2.msra.mxu0 0.0
        %1347 = vmatprep.subr.mxu0 0.0
        %1348 = vmatpush2.msra.mxu0 0.0
        %1349 = vmatprep.subr.mxu0 0.0
        %1350 = vmatpush2.msra.mxu0 0.0
        %1351 = vmatprep.subr.mxu0 0.0
        %1352 = vmatpush2.msra.mxu0 0.0
        %1353 = vmatprep.subr.mxu0 0.0
        %1354 = vmatpush2.msra.mxu0 0.0
        %1355 = vmatprep.subr.mxu0 0.0
        %1356 = vmatpush2.msra.mxu0 0.0
        %1357 = vmatprep.subr.mxu0 0.0
        %1358 = vmatpush2.msra.mxu0 0.0
        %1359 = vmatprep.subr.mxu0 0.0
        %1360 = vmatpush2.msra.mxu0 0.0
        %1361 = vmatprep.subr.mxu0 0.0
        %1362 = vmatpush2.msra.mxu0 0.0
        %1363 = vmatprep.mubr.f32.mxu0 0.0
        %1364 = vmatmul.mubr.f32.gmra.mxu0 %v1297
        %v1365 = vpop.f32.mrf.mxu0
        %v1366 = vadd.f32 0.0, %v1365
        %v1367 = vpop.f32.mrf.mxu0
        %1368 = vdwg.mxu0
        %v1369 = vrcp.pop %v1219
        %v1370 = vrcp.pop %v1222
        %v1371 = vmul.f32 %v1293, %v1369
        %v1372 = vmul.f32 %v1366, %v1370
        %v1373 = vld [vmem:[#allocation2] sm:$0xff]
        %v1374 = vld [vmem:[#allocation2 + $0x8] sm:$0xff]
        %v1375 = vld [vmem:[%s724] sm:$0xff]
        %v1377 = vsel %vm1045, %v1371, 0
        %v1380 = vsel %vm1045, %v1372, 0
        %1382 = vmatprep.subr.mxu0 0.0
        %1383 = vmatpush1.msra.mxu0 0.0
        %1384 = vmatprep.subr.mxu0 0.0
        %1385 = vmatpush1.msra.mxu0 0.0
        %1386 = vmatprep.subr.mxu0 0.0
        %1387 = vmatpush1.msra.mxu0 0.0
        %1388 = vmatprep.subr.mxu0 0.0
        %1389 = vmatpush1.msra.mxu0 0.0
        %1390 = vmatprep.subr.mxu0 0.0
        %1391 = vmatpush1.msra.mxu0 0.0
        %1392 = vmatprep.subr.mxu0 0.0
        %1393 = vmatpush1.msra.mxu0 0.0
        %1394 = vmatprep.subr.mxu0 0.0
        %1395 = vmatpush1.msra.mxu0 0.0
        %1396 = vmatprep.subr.mxu0 0.0
        %1397 = vmatpush1.msra.mxu0 0.0
        %1398 = vmatprep.subr.mxu0 0.0
        %1399 = vmatpush1.msra.mxu0 0.0
        %1400 = vmatprep.subr.mxu0 0.0
        %1401 = vmatpush1.msra.mxu0 0.0
        %1402 = vmatprep.subr.mxu0 0.0
        %1403 = vmatpush1.msra.mxu0 0.0
        %1404 = vmatprep.subr.mxu0 0.0
        %1405 = vmatpush1.msra.mxu0 0.0
        %1406 = vmatprep.subr.mxu0 0.0
        %1407 = vmatpush1.msra.mxu0 0.0
        %1408 = vmatprep.subr.mxu0 0.0
        %1409 = vmatpush1.msra.mxu0 0.0
        %1410 = vmatprep.subr.mxu0 0.0
        %1411 = vmatpush1.msra.mxu0 0.0
        %1412 = vmatprep.subr.mxu0 0.0
        %1413 = vmatpush1.msra.mxu0 %v1375
        %1414 = vmatprep.subr.mxu0 0.0
        %1415 = vmatpush2.msra.mxu0 0.0
        %1416 = vmatprep.subr.mxu0 0.0
        %1417 = vmatpush2.msra.mxu0 0.0
        %1418 = vmatprep.subr.mxu0 0.0
        %1419 = vmatpush2.msra.mxu0 0.0
        %1420 = vmatprep.subr.mxu0 0.0
        %1421 = vmatpush2.msra.mxu0 0.0
        %1422 = vmatprep.subr.mxu0 0.0
        %1423 = vmatpush2.msra.mxu0 0.0
        %1424 = vmatprep.subr.mxu0 0.0
        %1425 = vmatpush2.msra.mxu0 0.0
        %1426 = vmatprep.subr.mxu0 0.0
        %1427 = vmatpush2.msra.mxu0 0.0
        %1428 = vmatprep.subr.mxu0 0.0
        %1429 = vmatpush2.msra.mxu0 0.0
        %1430 = vmatprep.subr.mxu0 0.0
        %1431 = vmatpush2.msra.mxu0 0.0
        %1432 = vmatprep.subr.mxu0 0.0
        %1433 = vmatpush2.msra.mxu0 0.0
        %1434 = vmatprep.subr.mxu0 0.0
        %1435 = vmatpush2.msra.mxu0 0.0
        %1436 = vmatprep.subr.mxu0 0.0
        %1437 = vmatpush2.msra.mxu0 0.0
        %1438 = vmatprep.subr.mxu0 0.0
        %1439 = vmatpush2.msra.mxu0 0.0
        %1440 = vmatprep.subr.mxu0 0.0
        %1441 = vmatpush2.msra.mxu0 0.0
        %1442 = vmatprep.subr.mxu0 0.0
        %1443 = vmatpush2.msra.mxu0 0.0
        %1444 = vmatprep.subr.mxu0 0.0
        %1445 = vmatpush2.msra.mxu0 0.0
        %1446 = vmatprep.mubr.f32.mxu0 0.0
        %1447 = vmatmul.mubr.f32.gmra.mxu0 %v1377
        %v1448 = vpop.f32.mrf.mxu0
        %v1449 = vadd.f32 0.0, %v1448
        %v1450 = vpop.f32.mrf.mxu0
        %1451 = vmatprep.mubr.f32.mxu0 0.0
        %1452 = vmatmul.mubr.f32.gmra.mxu0 %v1380
        %v1453 = vpop.f32.mrf.mxu0
        %v1454 = vadd.f32 0.0, %v1453
        %v1455 = vpop.f32.mrf.mxu0
        %1456 = vdwg.mxu0
        %v1457 = vadd.f32 %v1373, %v1449
        %v1458 = vadd.f32 %v1374, %v1454
        %1459 = vst.msk [vmem:[#allocation2] sm:$0xff] %vm759, %v1457
        %1460 = vst.msk [vmem:[#allocation2 + $0x8] sm:$0xff] %vm759, %v1458
        %p1461 = scmp.eq.s32.totalorder %s35, 3
        // Predicated region
        $region97: #{tpu_custom_call.1} parent=91 // pred_check
          %p1462 = pneg %p1461
        $region98: #{tpu_custom_call.1} parent=91 // pred_check_branch
          %1464 = sbr.rel (%p1462) target = $region100
        $region99: #{tpu_custom_call.1} parent=91 // pred_region
          %v1465 = vld [vmem:[#allocation2] sm:$0xff]
          %v1466 = vld [vmem:[#allocation2 + $0x8] sm:$0xff]
          %v1467 = vld [vmem:[%s10] sm:$0x1]
          %v1468 = vld [vmem:[%s11] sm:$0x1]
          %v1469 = vsel %vm759, %v1465, 0.0
          %1470 = vadd.xlane.f32.xlu0 %v1469
          %v1471 = vpop.xlane.xlu0 %1470
          %v1472 = vsel %vm759, %v1466, 0.0
          %1473 = vadd.xlane.f32.xlu0 %v1472
          %v1474 = vpop.xlane.xlu0 %1473
          %v1475 = vrcp.pop 32.0
          %v1476 = vmul.f32 %v1471, %v1475
          %v1477 = vmul.f32 %v1474, %v1475
          %v1478 = vsub.f32 %v1465, %v1476
          %v1479 = vsub.f32 %v1466, %v1477
          %v1480 = vmul.f32 %v1478, %v1478
          %v1481 = vmul.f32 %v1479, %v1479
          %v1482 = vsel %vm759, %v1480, 0.0
          %1483 = vadd.xlane.f32.xlu0 %v1482
          %v1484 = vpop.xlane.xlu0 %1483
          %v1485 = vsel %vm759, %v1481, 0.0
          %1486 = vadd.xlane.f32.xlu0 %v1485
          %v1487 = vpop.xlane.xlu0 %1486
          %v1488 = vmul.f32 %v1484, %v1475
          %v1489 = vmul.f32 %v1487, %v1475
          %v1490 = vadd.f32 %v1488, 1e-05
          %v1491 = vadd.f32 %v1489, 1e-05
          %v1492 = vrsqrt.pop %v1490
          %v1493 = vrsqrt.pop %v1491
          %v1494 = vmul.f32 %v1478, %v1492
          %v1495 = vmul.f32 %v1479, %v1493
          %v1497 = vlaneseq
          %v1498 = vshrl.u32 %v1497, 7
          %v1499 = vsub.s32 0, %v1498
          %v1500 = vrot.slane %v1467, %v1499
          %v1502 = vmul.f32 %v1494, %v1500
          %v1503 = vmul.f32 %v1495, %v1500
          %v1505 = vlaneseq
          %v1506 = vshrl.u32 %v1505, 7
          %v1507 = vsub.s32 0, %v1506
          %v1508 = vrot.slane %v1468, %v1507
          %v1510 = vadd.f32 %v1502, %v1508
          %v1511 = vadd.f32 %v1503, %v1508
          %v1512 = vld [vmem:[%s12] sm:$0xff]
          %v1513 = vld [vmem:[%s12 + $0x8] sm:$0xff]
          %v1514 = vld [vmem:[%s12 + $0x10] sm:$0xff]
          %v1515 = vld [vmem:[%s12 + $0x18] sm:$0xff]
          %v1516 = vld [vmem:[%s13] sm:$0x1]
          %v1518 = vlaneseq
          %v1519 = vshrl.u32 %v1518, 7
          %v1520 = vsub.s32 0, %v1519
          %v1521 = vrot.slane %v1516, %v1520
          %v1524 = vsel %vm759, %v1510, 0
          %v1527 = vsel %vm759, %v1511, 0
          %1529 = vmatprep.subr.mxu0 0.0
          %1530 = vmatpush1.msra.mxu0 0.0
          %1531 = vmatprep.subr.mxu0 0.0
          %1532 = vmatpush1.msra.mxu0 0.0
          %1533 = vmatprep.subr.mxu0 0.0
          %1534 = vmatpush1.msra.mxu0 0.0
          %1535 = vmatprep.subr.mxu0 0.0
          %1536 = vmatpush1.msra.mxu0 0.0
          %1537 = vmatprep.subr.mxu0 0.0
          %1538 = vmatpush1.msra.mxu0 0.0
          %1539 = vmatprep.subr.mxu0 0.0
          %1540 = vmatpush1.msra.mxu0 0.0
          %1541 = vmatprep.subr.mxu0 0.0
          %1542 = vmatpush1.msra.mxu0 0.0
          %1543 = vmatprep.subr.mxu0 0.0
          %1544 = vmatpush1.msra.mxu0 0.0
          %1545 = vmatprep.subr.mxu0 0.0
          %1546 = vmatpush1.msra.mxu0 0.0
          %1547 = vmatprep.subr.mxu0 0.0
          %1548 = vmatpush1.msra.mxu0 0.0
          %1549 = vmatprep.subr.mxu0 0.0
          %1550 = vmatpush1.msra.mxu0 0.0
          %1551 = vmatprep.subr.mxu0 0.0
          %1552 = vmatpush1.msra.mxu0 0.0
          %1553 = vmatprep.subr.mxu0 0.0
          %1554 = vmatpush1.msra.mxu0 %v1515
          %1555 = vmatprep.subr.mxu0 0.0
          %1556 = vmatpush1.msra.mxu0 %v1514
          %1557 = vmatprep.subr.mxu0 0.0
          %1558 = vmatpush1.msra.mxu0 %v1513
          %1559 = vmatprep.subr.mxu0 0.0
          %1560 = vmatpush1.msra.mxu0 %v1512
          %1561 = vmatprep.subr.mxu0 0.0
          %1562 = vmatpush2.msra.mxu0 0.0
          %1563 = vmatprep.subr.mxu0 0.0
          %1564 = vmatpush2.msra.mxu0 0.0
          %1565 = vmatprep.subr.mxu0 0.0
          %1566 = vmatpush2.msra.mxu0 0.0
          %1567 = vmatprep.subr.mxu0 0.0
          %1568 = vmatpush2.msra.mxu0 0.0
          %1569 = vmatprep.subr.mxu0 0.0
          %1570 = vmatpush2.msra.mxu0 0.0
          %1571 = vmatprep.subr.mxu0 0.0
          %1572 = vmatpush2.msra.mxu0 0.0
          %1573 = vmatprep.subr.mxu0 0.0
          %1574 = vmatpush2.msra.mxu0 0.0
          %1575 = vmatprep.subr.mxu0 0.0
          %1576 = vmatpush2.msra.mxu0 0.0
          %1577 = vmatprep.subr.mxu0 0.0
          %1578 = vmatpush2.msra.mxu0 0.0
          %1579 = vmatprep.subr.mxu0 0.0
          %1580 = vmatpush2.msra.mxu0 0.0
          %1581 = vmatprep.subr.mxu0 0.0
          %1582 = vmatpush2.msra.mxu0 0.0
          %1583 = vmatprep.subr.mxu0 0.0
          %1584 = vmatpush2.msra.mxu0 0.0
          %1585 = vmatprep.subr.mxu0 0.0
          %1586 = vmatpush2.msra.mxu0 0.0
          %1587 = vmatprep.subr.mxu0 0.0
          %1588 = vmatpush2.msra.mxu0 0.0
          %1589 = vmatprep.subr.mxu0 0.0
          %1590 = vmatpush2.msra.mxu0 0.0
          %1591 = vmatprep.subr.mxu0 0.0
          %1592 = vmatpush2.msra.mxu0 0.0
          %1593 = vmatprep.mubr.f32.mxu0 0.0
          %1594 = vmatmul.mubr.f32.gmra.mxu0 %v1524
          %v1595 = vpop.f32.mrf.mxu0
          %v1596 = vadd.f32 %v1521, %v1595
          %v1597 = vpop.f32.mrf.mxu0
          %1598 = vmatprep.mubr.f32.mxu0 0.0
          %1599 = vmatmul.mubr.f32.gmra.mxu0 %v1527
          %v1600 = vpop.f32.mrf.mxu0
          %v1601 = vadd.f32 %v1521, %v1600
          %v1602 = vpop.f32.mrf.mxu0
          %1603 = vdwg.mxu0
          %v1604 = vmax.f32 %v1596, 0.0
          %v1605 = vmax.f32 %v1601, 0.0
          %v1606 = vld [vmem:[%s14] sm:$0xff]
          %v1607 = vld [vmem:[%s14 + $0x8] sm:$0xff]
          %v1608 = vld [vmem:[%s14 + $0x10] sm:$0xff]
          %v1609 = vld [vmem:[%s14 + $0x18] sm:$0xff]
          %v1610 = vld [vmem:[%s14 + $0x20] sm:$0xff]
          %v1611 = vld [vmem:[%s14 + $0x28] sm:$0xff]
          %v1612 = vld [vmem:[%s14 + $0x30] sm:$0xff]
          %v1613 = vld [vmem:[%s14 + $0x38] sm:$0xff]
          %v1614 = vld [vmem:[%s14 + $0x40] sm:$0xff]
          %v1615 = vld [vmem:[%s14 + $0x48] sm:$0xff]
          %v1616 = vld [vmem:[%s14 + $0x50] sm:$0xff]
          %v1617 = vld [vmem:[%s14 + $0x58] sm:$0xff]
          %v1618 = vld [vmem:[%s14 + $0x60] sm:$0xff]
          %v1619 = vld [vmem:[%s14 + $0x68] sm:$0xff]
          %v1620 = vld [vmem:[%s14 + $0x70] sm:$0xff]
          %v1621 = vld [vmem:[%s14 + $0x78] sm:$0xff]
          %v1622 = vld [vmem:[%s15] sm:$0x1]
          %v1624 = vlaneseq
          %v1625 = vshrl.u32 %v1624, 7
          %v1626 = vsub.s32 0, %v1625
          %v1627 = vrot.slane %v1622, %v1626
          %1629 = vmatprep.subr.mxu0 0.0
          %1630 = vmatpush1.msra.mxu0 %v1621
          %1631 = vmatprep.subr.mxu0 0.0
          %1632 = vmatpush1.msra.mxu0 %v1620
          %1633 = vmatprep.subr.mxu0 0.0
          %1634 = vmatpush1.msra.mxu0 %v1619
          %1635 = vmatprep.subr.mxu0 0.0
          %1636 = vmatpush1.msra.mxu0 %v1618
          %1637 = vmatprep.subr.mxu0 0.0
          %1638 = vmatpush1.msra.mxu0 %v1617
          %1639 = vmatprep.subr.mxu0 0.0
          %1640 = vmatpush1.msra.mxu0 %v1616
          %1641 = vmatprep.subr.mxu0 0.0
          %1642 = vmatpush1.msra.mxu0 %v1615
          %1643 = vmatprep.subr.mxu0 0.0
          %1644 = vmatpush1.msra.mxu0 %v1614
          %1645 = vmatprep.subr.mxu0 0.0
          %1646 = vmatpush1.msra.mxu0 %v1613
          %1647 = vmatprep.subr.mxu0 0.0
          %1648 = vmatpush1.msra.mxu0 %v1612
          %1649 = vmatprep.subr.mxu0 0.0
          %1650 = vmatpush1.msra.mxu0 %v1611
          %1651 = vmatprep.subr.mxu0 0.0
          %1652 = vmatpush1.msra.mxu0 %v1610
          %1653 = vmatprep.subr.mxu0 0.0
          %1654 = vmatpush1.msra.mxu0 %v1609
          %1655 = vmatprep.subr.mxu0 0.0
          %1656 = vmatpush1.msra.mxu0 %v1608
          %1657 = vmatprep.subr.mxu0 0.0
          %1658 = vmatpush1.msra.mxu0 %v1607
          %1659 = vmatprep.subr.mxu0 0.0
          %1660 = vmatpush1.msra.mxu0 %v1606
          %1661 = vmatprep.subr.mxu0 0.0
          %1662 = vmatpush2.msra.mxu0 0.0
          %1663 = vmatprep.subr.mxu0 0.0
          %1664 = vmatpush2.msra.mxu0 0.0
          %1665 = vmatprep.subr.mxu0 0.0
          %1666 = vmatpush2.msra.mxu0 0.0
          %1667 = vmatprep.subr.mxu0 0.0
          %1668 = vmatpush2.msra.mxu0 0.0
          %1669 = vmatprep.subr.mxu0 0.0
          %1670 = vmatpush2.msra.mxu0 0.0
          %1671 = vmatprep.subr.mxu0 0.0
          %1672 = vmatpush2.msra.mxu0 0.0
          %1673 = vmatprep.subr.mxu0 0.0
          %1674 = vmatpush2.msra.mxu0 0.0
          %1675 = vmatprep.subr.mxu0 0.0
          %1676 = vmatpush2.msra.mxu0 0.0
          %1677 = vmatprep.subr.mxu0 0.0
          %1678 = vmatpush2.msra.mxu0 0.0
          %1679 = vmatprep.subr.mxu0 0.0
          %1680 = vmatpush2.msra.mxu0 0.0
          %1681 = vmatprep.subr.mxu0 0.0
          %1682 = vmatpush2.msra.mxu0 0.0
          %1683 = vmatprep.subr.mxu0 0.0
          %1684 = vmatpush2.msra.mxu0 0.0
          %1685 = vmatprep.subr.mxu0 0.0
          %1686 = vmatpush2.msra.mxu0 0.0
          %1687 = vmatprep.subr.mxu0 0.0
          %1688 = vmatpush2.msra.mxu0 0.0
          %1689 = vmatprep.subr.mxu0 0.0
          %1690 = vmatpush2.msra.mxu0 0.0
          %1691 = vmatprep.subr.mxu0 0.0
          %1692 = vmatpush2.msra.mxu0 0.0
          %1693 = vmatprep.mubr.f32.mxu0 0.0
          %1694 = vmatmul.mubr.f32.gmra.mxu0 %v1604
          %v1695 = vpop.f32.mrf.mxu0
          %v1696 = vadd.f32 %v1627, %v1695
          %v1697 = vpop.f32.mrf.mxu0
          %1698 = vmatprep.mubr.f32.mxu0 0.0
          %1699 = vmatmul.mubr.f32.gmra.mxu0 %v1605
          %v1700 = vpop.f32.mrf.mxu0
          %v1701 = vadd.f32 %v1627, %v1700
          %v1702 = vpop.f32.mrf.mxu0
          %1703 = vdwg.mxu0
          %v1704 = vadd.f32 %v1510, %v1696
          %v1705 = vadd.f32 %v1511, %v1701
          %v1706 = vld [vmem:[%s16] sm:$0x1]
          %v1707 = vld [vmem:[%s17] sm:$0x1]
          %v1708 = vsel %vm759, %v1704, 0.0
          %1709 = vadd.xlane.f32.xlu0 %v1708
          %v1710 = vpop.xlane.xlu0 %1709
          %v1711 = vsel %vm759, %v1705, 0.0
          %1712 = vadd.xlane.f32.xlu0 %v1711
          %v1713 = vpop.xlane.xlu0 %1712
          %v1714 = vmul.f32 %v1710, %v1475
          %v1715 = vmul.f32 %v1713, %v1475
          %v1716 = vsub.f32 %v1704, %v1714
          %v1717 = vsub.f32 %v1705, %v1715
          %v1718 = vmul.f32 %v1716, %v1716
          %v1719 = vmul.f32 %v1717, %v1717
          %v1720 = vsel %vm759, %v1718, 0.0
          %1721 = vadd.xlane.f32.xlu0 %v1720
          %v1722 = vpop.xlane.xlu0 %1721
          %v1723 = vsel %vm759, %v1719, 0.0
          %1724 = vadd.xlane.f32.xlu0 %v1723
          %v1725 = vpop.xlane.xlu0 %1724
          %v1726 = vmul.f32 %v1722, %v1475
          %v1727 = vmul.f32 %v1725, %v1475
          %v1728 = vadd.f32 %v1726, 1e-05
          %v1729 = vadd.f32 %v1727, 1e-05
          %v1730 = vrsqrt.pop %v1728
          %v1731 = vrsqrt.pop %v1729
          %v1732 = vmul.f32 %v1716, %v1730
          %v1733 = vmul.f32 %v1717, %v1731
          %v1735 = vlaneseq
          %v1736 = vshrl.u32 %v1735, 7
          %v1737 = vsub.s32 0, %v1736
          %v1738 = vrot.slane %v1706, %v1737
          %v1740 = vmul.f32 %v1732, %v1738
          %v1741 = vmul.f32 %v1733, %v1738
          %v1743 = vlaneseq
          %v1744 = vshrl.u32 %v1743, 7
          %v1745 = vsub.s32 0, %v1744
          %v1746 = vrot.slane %v1707, %v1745
          %v1748 = vadd.f32 %v1740, %v1746
          %v1749 = vadd.f32 %v1741, %v1746
          %1750 = vst.msk [vmem:[#allocation3] sm:$0xff] %vm759, %v1748
          %1751 = vst.msk [vmem:[#allocation3 + $0x8] sm:$0xff] %vm759, %v1749
        $region100: #{tpu_custom_call.1} parent=91 // pred_fallthru
          _
        // Predicated region
        $region101: #{tpu_custom_call.1} parent=91 // pred_check
          %p1752 = pneg %p483
        $region102: #{tpu_custom_call.1} parent=91 // pred_check_branch
          %1754 = sbr.rel (%p1752) target = $region104
        $region103: #{tpu_custom_call.1} parent=91 // pred_region
          %s1755 = smul.u32 2, %s34
          %s1757 = ssub.s32 256, 256
          %1758 = vsyncadd [#allocation4], %s1757
          %s1759 = smul.addr %s1755, 128
          %s1760 = scalar_lea.hbm %s18, %s1759
          %s1761 = sshll.u32 [#allocation3], 4
          %s1762 = int_to_ptr.vmem [resolvable:$true] %s1761
          %1767 = dma.vmem_to_hbm [thread:$0]  %s1762, 256, %s1760, [#allocation4], 128, 128, 8
        $region104: #{tpu_custom_call.1} parent=91 // pred_fallthru
          _
        // Predicated region
        $region105: #{tpu_custom_call.1} parent=91 // pred_check
          %p1768 = pneg %p483
        $region106: #{tpu_custom_call.1} parent=91 // pred_check_branch
          %1770 = sbr.rel (%p1768) target = $region108
        $region107: #{tpu_custom_call.1} parent=91 // pred_region
          %1771 = dma.done [#allocation4], 256
        $region108: #{tpu_custom_call.1} parent=91 // pred_fallthru
          _
      $region92: #{tpu_custom_call.1} parent=5 // pred_fallthru
        _
      %p1772 = scmp.le.s32.totalorder 2, %s25
      // Predicated region
      $region109: #{tpu_custom_call.1} parent=5 // pred_check
        %p1773 = pneg %p1772
      $region110: #{tpu_custom_call.1} parent=5 // pred_check_branch
        %1775 = sbr.rel (%p1773) target = $region112
      $region111: #{tpu_custom_call.1} parent=5 // pred_region
        %s1776 = ssub.s32 %s25, 2
      $region112: #{tpu_custom_call.1} parent=5 // pred_fallthru
        _
    $region6: #{tpu_custom_call.1} parent=1 // loop_footer
      %s29 = sadd.s32 1, %s25
    $region7: #{tpu_custom_call.1} parent=1 // loop_footer_branch
      %24 = sbr.rel target = $region3
    $region8: #{tpu_custom_call.1} parent=1 // loop_exit
      _
    %1777 = vsyncpa [#allocation4], 1
    %s1778 = scalar_lea.sflag [#allocation4], 1
    %1779 = vsyncpa %s1778, 1

</llo_original>
